<compile_context>
chip_gen: v7x
topology: tpu7x:2x2x1
jax: 0.10.0
libtpu: 0.0.40
codegen_flags: <defaults>
</compile_context>

<pallas_src>
import math
import jax
import jax.numpy as jnp
from jax import lax
from jax.experimental import pallas as pl
from jax.experimental.pallas import tpu as pltpu

# static config implied by the PyTorch forward (H = W = 16, first 64 tokens bypass convs)
H, W = 16, 16
HW = H * W
N_Z = 64
N_TOK = N_Z + HW  # 320 tokens total

# 2-D dot_general dimension numbers (MXU absorbs operand transposes)
NT_2D = (((1,), (1,)), ((), ()))   # contract last dim of both   (rhs "transposed")
NN_2D = (((1,), (0,)), ((), ()))   # plain matmul
TN_2D = (((0,), (0,)), ((), ()))   # contract first dim of both  (lhs "transposed")


# ----------------------------- Pallas kernel -------------------------------

def _erf(x):
    # Abramowitz & Stegun 7.1.26 — accurate to ~1.5e-7 (f32 precision).
    a1, a2, a3, a4, a5 = 0.254829592, -0.284496736, 1.421413741, -1.453152027, 1.061405429
    p = 0.3275911
    s = jnp.where(x >= 0.0, 1.0, -1.0)
    ax = jnp.abs(x)
    t = 1.0 / (1.0 + p * ax)
    poly = ((((a5 * t + a4) * t + a3) * t + a2) * t + a1) * t
    return s * (1.0 - poly * jnp.exp(-ax * ax))


def _gelu_exact(x):
    return 0.5 * x * (1.0 + _erf(x * 0.7071067811865476))


def fused_adapter_kernel(x_ref, fc1wt_ref, fc1b_ref, fc1wtc_ref, cvec_ref,
                         cbw_ref, wtab_ref, fc2w_ref, fc2b_ref, o_ref):
    x = x_ref[0]                                   # (320, c1)
    fc2_w = fc2w_ref[...]                          # (c2, c1)
    fc2_b = fc2b_ref[...]                          # (1, c1)

    # ---------------- z path: tokens [0, 64) ----------------
    hz = lax.dot_general(x[:N_Z], fc1wt_ref[...], NT_2D,
                         preferred_element_type=jnp.float32) + fc1b_ref[...]   # (64, c2)
    oz = lax.dot_general(hz, fc2_w, NN_2D,
                         preferred_element_type=jnp.float32) + fc2_b           # (64, c1)
    o_ref[0, 0:N_Z, :] = oz.astype(o_ref.dtype)

    # ------------- conv path, channel-major (c2, HW) -------------
    cvec = cvec_ref[...]                           # (c2, 2)
    conv_bias = cvec[:, 0:1]                       # pw1_w*fc1_b + pw1_b
    cb_const = cvec[:, 1:2]                        # folded cb11 bias + BN shift (x3)

    # fc1 with pwconv1 (depthwise 1x1) scale pre-folded into the rows.
    x0 = lax.dot_general(fc1wtc_ref[...], x[N_Z:], NT_2D,
                         preferred_element_type=jnp.float32) + conv_bias       # (c2, HW)

    # ONE effective 7x7 depthwise pass (w3+w5+w7 collapsed); boundary masks are
    # pre-folded into wtab, so each tap is just roll + mul + add.  The centre
    # tap (off == 0, t == 24) seeds the accumulator — no zero fill, one fewer add.
    acc = wtab_ref[24] * x0
    for t in range(49):
        if t == 24:
            continue
        i, j = divmod(t, 7)
        off = (i - 3) * W + (j - 3)                # result[n] needs x0[n + off]
        shifted = pltpu.roll(x0, shift=(-off) % HW, axis=1)
        acc = acc + wtab_ref[t] * shifted

    # Single cb11 (1x1 conv + folded BN) applied to the summed branches.
    s = x0 + lax.dot_general(cbw_ref[...], acc, NN_2D,
                             preferred_element_type=jnp.float32) + cb_const    # (c2, HW)
    g = _gelu_exact(s)

    oc = lax.dot_general(g, fc2_w, TN_2D,
                         preferred_element_type=jnp.float32) + fc2_b           # (HW, c1)
    o_ref[0, N_Z:N_TOK, :] = oc.astype(o_ref.dtype)


# ------------------------ parameter folding (wrapper) -----------------------

def _prepare(P):
    """Algebraically fold pwconv1 / dw3+dw5+dw7 / cb11 / BN into a few arrays."""
    c1, c2 = P["fc1_w"].shape
    f32 = jnp.float32

    fc1_wt = P["fc1_w"].T.astype(f32)                         # (c2, c1)
    fc1_b_row = P["fc1_b"].reshape(1, c2).astype(f32)
    fc1_b_col = P["fc1_b"].reshape(c2, 1).astype(f32)
    pw1_w = P["pw1_w"].reshape(c2, 1).astype(f32)
    pw1_b = P["pw1_b"].reshape(c2, 1).astype(f32)

    # pwconv1 (depthwise 1x1) folded into the conv-branch fc1.
    fc1_wt_conv = pw1_w * fc1_wt                              # (c2, c1)
    conv_bias = pw1_w * fc1_b_col + pw1_b                     # (c2, 1)

    # Effective 7x7 depthwise kernel = zero-pad(w3) + zero-pad(w5) + w7.
    w3 = P["dw3_w"].reshape(c2, 3, 3)
    w5 = P["dw5_w"].reshape(c2, 5, 5)
    w7 = P["dw7_w"].reshape(c2, 7, 7)
    w_eff = w7.at[:, 2:5, 2:5].add(w3)
    w_eff = w_eff.at[:, 1:6, 1:6].add(w5)
    b_eff = (P["dw3_b"] + P["dw5_b"] + P["dw7_b"]).reshape(c2, 1)

    # cb11 + BatchNorm (inference running stats) folded; applied once to the sum:
    #   sum_k cb11(DWk(x0)) = cbw_eff @ DW_eff(x0) + cb_const
    bn_s = P["bn_scale"].reshape(c2, 1)
    bn_b = P["bn_shift"].reshape(c2, 1)
    cbw_eff = (bn_s * P["cb_w"]).astype(f32)                  # (c2, c2)
    cb_const = cbw_eff @ b_eff + 3.0 * (bn_s * P["cb_b"].reshape(c2, 1) + bn_b)

    cvec = jnp.concatenate([conv_bias, cb_const], axis=1).astype(f32)   # (c2, 2)

    # Per-tap boundary masks ('same' zero padding) folded into the tap weights.
    n = jnp.arange(HW)
    hh, ww = n // W, n % W
    taps = []
    for i in range(7):
        for j in range(7):
            oh, ow = i - 3, j - 3
            valid = ((hh + oh >= 0) & (hh + oh < H) &
                     (ww + ow >= 0) & (ww + ow < W)).astype(f32)
            taps.append(w_eff[:, i, j][:, None] * valid[None, :])
    wtab = jnp.stack(taps, axis=0).astype(f32)                # (49, c2, HW)  ~392 KiB

    return dict(fc1_wt=fc1_wt, fc1_b_row=fc1_b_row, fc1_wt_conv=fc1_wt_conv,
                cvec=cvec, cbw=cbw_eff, wtab=wtab,
                fc2_w=P["fc2_w"].astype(f32),
                fc2_b=P["fc2_b"].reshape(1, c1).astype(f32))


def bi_adapter_lsa(x, params):
    # x: (B, 320, c1)
    B, N, c1 = x.shape
    assert N == N_TOK, (N, N_TOK)
    d = _prepare(params)
    c2 = d["fc1_wt"].shape[0]

    fused = pl.pallas_call(
        fused_adapter_kernel,
        out_shape=jax.ShapeDtypeStruct((B, N_TOK, c1), x.dtype),
        grid=(B,),
        in_specs=[
            pl.BlockSpec((1, N_TOK, c1), lambda b: (b, 0, 0)),   # x
            pl.BlockSpec((c2, c1), lambda b: (0, 0)),            # fc1_wt (z path)
            pl.BlockSpec((1, c2), lambda b: (0, 0)),             # fc1_b row (z path)
            pl.BlockSpec((c2, c1), lambda b: (0, 0)),            # fc1_wt_conv (pw1-scaled)
            pl.BlockSpec((c2, 2), lambda b: (0, 0)),             # [conv_bias, cb_const]
            pl.BlockSpec((c2, c2), lambda b: (0, 0)),            # cbw_eff (cb11*BN)
            pl.BlockSpec((49, c2, HW), lambda b: (0, 0, 0)),     # masked tap weights
            pl.BlockSpec((c2, c1), lambda b: (0, 0)),            # fc2_w
            pl.BlockSpec((1, c1), lambda b: (0, 0)),             # fc2_b
        ],
        out_specs=pl.BlockSpec((1, N_TOK, c1), lambda b: (b, 0, 0)),
        compiler_params=pltpu.CompilerParams(dimension_semantics=("parallel",)),
    )
    return fused(x, d["fc1_wt"], d["fc1_b_row"], d["fc1_wt_conv"], d["cvec"],
                 d["cbw"], d["wtab"], d["fc2_w"], d["fc2_b"])


# ----------------------------- pure-JAX reference --------------------------

def reference(x, P):
    c2 = P["cb_w"].shape[0]
    B = x.shape[0]
    hp = jnp.einsum("bnc,cd->bnd", x, P["fc1_w"], precision="highest") + P["fc1_b"][0]
    z = hp[:, :N_Z, :]
    xs = hp[:, N_Z:, :]
    img = xs.transpose(0, 2, 1).reshape(B, c2, H, W)                       # NCHW
    img = img * P["pw1_w"].reshape(1, c2, 1, 1) + P["pw1_b"].reshape(1, c2, 1, 1)

    def dw(t, w, b, K):
        wk = w.reshape(c2, 1, K, K)
        y = lax.conv_general_dilated(t, wk, (1, 1), "SAME",
                                     dimension_numbers=("NCHW", "OIHW", "NCHW"),
                                     feature_group_count=c2, precision="highest")
        return y + b.reshape(1, c2, 1, 1)

    x1 = dw(img, P["dw3_w"], P["dw3_b"], 3)
    x2 = dw(img, P["dw5_w"], P["dw5_b"], 5)
    x3 = dw(img, P["dw7_w"], P["dw7_b"], 7)

    def cb(t):
        y = jnp.einsum("oc,bchw->bohw", P["cb_w"], t, precision="highest") + P["cb_b"].reshape(1, c2, 1, 1)
        return y * P["bn_scale"].reshape(1, c2, 1, 1) + P["bn_shift"].reshape(1, c2, 1, 1)

    s = img + cb(x1) + cb(x2) + cb(x3)
    g = jax.nn.gelu(s, approximate=False)
    gt = g.reshape(B, c2, HW).transpose(0, 2, 1)
    cat = jnp.concatenate([z, gt], axis=1)
    return jnp.einsum("bnc,cd->bnd", cat, P["fc2_w"], precision="highest") + P["fc2_b"][0]


# ----------------------------------- main -----------------------------------

if __name__ == "__main__":
    c1, c2 = 128, 8        # c1 = 128 -> lane-dense (unmasked) output stores
    B = 2

    key = jax.random.PRNGKey(0)
    k = jax.random.split(key, 20)

    def kaiming(kk, shape, fan_in):
        return jax.random.normal(kk, shape, jnp.float32) * math.sqrt(2.0 / fan_in)

    def bias_init(kk, shape, fan_in):
        bound = 1.0 / math.sqrt(fan_in)
        return jax.random.uniform(kk, shape, jnp.float32, -bound, bound)

    params = dict(
        fc1_w=kaiming(k[0], (c1, c2), c1),                 # Linear(c1, c2).weight^T
        fc1_b=bias_init(k[1], (1, c2), c1),
        pw1_w=kaiming(k[2], (c2, 1), 1),                   # DWC(c2, 1): depthwise 1x1
        pw1_b=bias_init(k[3], (c2, 1), 1),
        dw3_w=kaiming(k[4], (c2, 9), 9),                   # DWC(c2, 3)
        dw3_b=bias_init(k[5], (c2, 1), 9),
        dw5_w=kaiming(k[6], (c2, 25), 25),                 # DWC(c2, 5)
        dw5_b=bias_init(k[7], (c2, 1), 25),
        dw7_w=kaiming(k[8], (c2, 49), 49),                 # DWC(c2, 7)
        dw7_b=bias_init(k[9], (c2, 1), 49),
        cb_w=kaiming(k[10], (c2, c2), c2),                 # CB11 1x1 conv, (out, in)
        cb_b=bias_init(k[11], (c2, 1), c2),
        bn_scale=jnp.full((c2, 1), 1.0 / math.sqrt(1.0 + 1e-5), jnp.float32),
        bn_shift=jnp.zeros((c2, 1), jnp.float32),
        fc2_w=kaiming(k[12], (c2, c1), c2),                # Linear(c2, c1).weight^T
        fc2_b=bias_init(k[13], (1, c1), c2),
    )

    x = jax.random.normal(k[14], (B, N_TOK, c1), jnp.float32)

    fwd = jax.jit(bi_adapter_lsa)
    out = jax.block_until_ready(fwd(x, params))

    ref = reference(x, params)
    err = float(jnp.max(jnp.abs(out - ref)))
    assert out.shape == (B, N_TOK, c1), out.shape
    assert err < 1e-2, f"mismatch vs reference: {err}"
    print("KERNEL_OK")
</pallas_src>

<mosaic_0001>
module attributes {stable_mosaic.version = 11 : i64} {
  func.func @fused_adapter_kernel(%arg0: i32, %arg1: memref<1x320x128xf32, #tpu.memory_space<vmem>>, %arg2: memref<8x128xf32, #tpu.memory_space<vmem>>, %arg3: memref<1x8xf32, #tpu.memory_space<vmem>>, %arg4: memref<8x128xf32, #tpu.memory_space<vmem>>, %arg5: memref<8x2xf32, #tpu.memory_space<vmem>>, %arg6: memref<8x8xf32, #tpu.memory_space<vmem>>, %arg7: memref<49x8x256xf32, #tpu.memory_space<vmem>>, %arg8: memref<8x128xf32, #tpu.memory_space<vmem>>, %arg9: memref<1x128xf32, #tpu.memory_space<vmem>>, %arg10: memref<1x320x128xf32, #tpu.memory_space<vmem>>) attributes {dimension_semantics = [#tpu.dimension_semantics<parallel>], iteration_bounds = array<i64: 2>, scalar_prefetch = 0 : i64, scratch_operands = 0 : i64, tpu.core_type = #tpu.core_type<tc>, window_params = [{transform_indices = @transform_0, window_bounds = array<i64: 1, 320, 128>}, {pipeline_mode = #tpu.pipeline_mode<synchronous>, transform_indices = @transform_1, window_bounds = array<i64: 8, 128>}, {pipeline_mode = #tpu.pipeline_mode<synchronous>, transform_indices = @transform_2, window_bounds = array<i64: 1, 8>}, {pipeline_mode = #tpu.pipeline_mode<synchronous>, transform_indices = @transform_3, window_bounds = array<i64: 8, 128>}, {pipeline_mode = #tpu.pipeline_mode<synchronous>, transform_indices = @transform_4, window_bounds = array<i64: 8, 2>}, {pipeline_mode = #tpu.pipeline_mode<synchronous>, transform_indices = @transform_5, window_bounds = array<i64: 8, 8>}, {pipeline_mode = #tpu.pipeline_mode<synchronous>, transform_indices = @transform_6, window_bounds = array<i64: 49, 8, 256>}, {pipeline_mode = #tpu.pipeline_mode<synchronous>, transform_indices = @transform_7, window_bounds = array<i64: 8, 128>}, {pipeline_mode = #tpu.pipeline_mode<synchronous>, transform_indices = @transform_8, window_bounds = array<i64: 1, 128>}, {transform_indices = @transform_9, window_bounds = array<i64: 1, 320, 128>}]} {
    %c0 = arith.constant 0 : index
    %c0_0 = arith.constant 0 : index
    %c0_1 = arith.constant 0 : index
    %0 = vector.load %arg1[%c0, %c0_0, %c0_1] : memref<1x320x128xf32, #tpu.memory_space<vmem>>, vector<1x320x128xf32>
    %1 = vector.shape_cast %0 : vector<1x320x128xf32> to vector<320x128xf32>
    %c0_2 = arith.constant 0 : index
    %c0_3 = arith.constant 0 : index
    %2 = vector.load %arg8[%c0_2, %c0_3] : memref<8x128xf32, #tpu.memory_space<vmem>>, vector<8x128xf32>
    %c0_4 = arith.constant 0 : index
    %c0_5 = arith.constant 0 : index
    %3 = vector.load %arg9[%c0_4, %c0_5] : memref<1x128xf32, #tpu.memory_space<vmem>>, vector<1x128xf32>
    %4 = vector.extract_strided_slice %1 {offsets = [0, 0], sizes = [64, 128], strides = [1, 1]} : vector<320x128xf32> to vector<64x128xf32>
    %c0_6 = arith.constant 0 : index
    %c0_7 = arith.constant 0 : index
    %5 = vector.load %arg2[%c0_6, %c0_7] : memref<8x128xf32, #tpu.memory_space<vmem>>, vector<8x128xf32>
    %cst = arith.constant dense<0.000000e+00> : vector<64x8xf32>
    %6 = tpu.matmul %4, %5, %cst {dimension_numbers = #tpu.dot_dimension_numbers<[1], [1], [0], [0], [0, 0, 1, 0], [], []>} : vector<64x128xf32>, vector<8x128xf32>, vector<64x8xf32> -> vector<64x8xf32>
    %c0_8 = arith.constant 0 : index
    %c0_9 = arith.constant 0 : index
    %7 = vector.load %arg3[%c0_8, %c0_9] : memref<1x8xf32, #tpu.memory_space<vmem>>, vector<1x8xf32>
    %8 = vector.broadcast %7 : vector<1x8xf32> to vector<64x8xf32>
    %9 = arith.addf %6, %8 : vector<64x8xf32>
    %cst_10 = arith.constant dense<0.000000e+00> : vector<64x128xf32>
    %10 = tpu.matmul %9, %2, %cst_10 {dimension_numbers = #tpu.dot_dimension_numbers<[1], [0], [0], [1], [0, 0, 1, 1], [], []>} : vector<64x8xf32>, vector<8x128xf32>, vector<64x128xf32> -> vector<64x128xf32>
    %11 = vector.broadcast %3 : vector<1x128xf32> to vector<64x128xf32>
    %12 = arith.addf %10, %11 : vector<64x128xf32>
    %c0_11 = arith.constant 0 : index
    %c0_12 = arith.constant 0 : index
    %c0_13 = arith.constant 0 : index
    %13 = vector.load %arg10[%c0_11, %c0_12, %c0_13] : memref<1x320x128xf32, #tpu.memory_space<vmem>>, vector<1x64x128xf32>
    %14 = vector.shape_cast %13 : vector<1x64x128xf32> to vector<64x128xf32>
    %15 = vector.shape_cast %12 : vector<64x128xf32> to vector<1x64x128xf32>
    tpu.vector_store %arg10[%c0_11, %c0_12, %c0_13], %15 {strides = array<i32>} : memref<1x320x128xf32, #tpu.memory_space<vmem>>, vector<1x64x128xf32>,
    %c0_14 = arith.constant 0 : index
    %c0_15 = arith.constant 0 : index
    %16 = vector.load %arg5[%c0_14, %c0_15] : memref<8x2xf32, #tpu.memory_space<vmem>>, vector<8x2xf32>
    %17 = vector.extract_strided_slice %16 {offsets = [0, 0], sizes = [8, 1], strides = [1, 1]} : vector<8x2xf32> to vector<8x1xf32>
    %18 = vector.extract_strided_slice %16 {offsets = [0, 1], sizes = [8, 1], strides = [1, 1]} : vector<8x2xf32> to vector<8x1xf32>
    %c0_16 = arith.constant 0 : index
    %c0_17 = arith.constant 0 : index
    %19 = vector.load %arg4[%c0_16, %c0_17] : memref<8x128xf32, #tpu.memory_space<vmem>>, vector<8x128xf32>
    %20 = vector.extract_strided_slice %1 {offsets = [64, 0], sizes = [256, 128], strides = [1, 1]} : vector<320x128xf32> to vector<256x128xf32>
    %cst_18 = arith.constant dense<0.000000e+00> : vector<8x256xf32>
    %21 = tpu.matmul %19, %20, %cst_18 {dimension_numbers = #tpu.dot_dimension_numbers<[1], [1], [0], [0], [0, 0, 1, 0], [], []>} : vector<8x128xf32>, vector<256x128xf32>, vector<8x256xf32> -> vector<8x256xf32>
    %22 = vector.broadcast %17 : vector<8x1xf32> to vector<8x256xf32>
    %23 = arith.addf %21, %22 : vector<8x256xf32>
    %c24 = arith.constant 24 : index
    %c0_19 = arith.constant 0 : index
    %c0_20 = arith.constant 0 : index
    %24 = vector.load %arg7[%c24, %c0_19, %c0_20] : memref<49x8x256xf32, #tpu.memory_space<vmem>>, vector<1x8x256xf32>
    %25 = vector.shape_cast %24 : vector<1x8x256xf32> to vector<8x256xf32>
    %26 = arith.mulf %25, %23 : vector<8x256xf32>
    %c51_i32 = arith.constant 51 : i32
    %27 = tpu.dynamic_rotate %23 by %c51_i32 dim 1 : vector<8x256xf32>, i32 -> vector<8x256xf32>
    %c0_21 = arith.constant 0 : index
    %c0_22 = arith.constant 0 : index
    %c0_23 = arith.constant 0 : index
    %28 = vector.load %arg7[%c0_21, %c0_22, %c0_23] : memref<49x8x256xf32, #tpu.memory_space<vmem>>, vector<1x8x256xf32>
    %29 = vector.shape_cast %28 : vector<1x8x256xf32> to vector<8x256xf32>
    %30 = arith.mulf %29, %27 : vector<8x256xf32>
    %31 = arith.addf %26, %30 : vector<8x256xf32>
    %c50_i32 = arith.constant 50 : i32
    %32 = tpu.dynamic_rotate %23 by %c50_i32 dim 1 : vector<8x256xf32>, i32 -> vector<8x256xf32>
    %c1 = arith.constant 1 : index
    %c0_24 = arith.constant 0 : index
    %c0_25 = arith.constant 0 : index
    %33 = vector.load %arg7[%c1, %c0_24, %c0_25] : memref<49x8x256xf32, #tpu.memory_space<vmem>>, vector<1x8x256xf32>
    %34 = vector.shape_cast %33 : vector<1x8x256xf32> to vector<8x256xf32>
    %35 = arith.mulf %34, %32 : vector<8x256xf32>
    %36 = arith.addf %31, %35 : vector<8x256xf32>
    %c49_i32 = arith.constant 49 : i32
    %37 = tpu.dynamic_rotate %23 by %c49_i32 dim 1 : vector<8x256xf32>, i32 -> vector<8x256xf32>
    %c2 = arith.constant 2 : index
    %c0_26 = arith.constant 0 : index
    %c0_27 = arith.constant 0 : index
    %38 = vector.load %arg7[%c2, %c0_26, %c0_27] : memref<49x8x256xf32, #tpu.memory_space<vmem>>, vector<1x8x256xf32>
    %39 = vector.shape_cast %38 : vector<1x8x256xf32> to vector<8x256xf32>
    %40 = arith.mulf %39, %37 : vector<8x256xf32>
    %41 = arith.addf %36, %40 : vector<8x256xf32>
    %c48_i32 = arith.constant 48 : i32
    %42 = tpu.dynamic_rotate %23 by %c48_i32 dim 1 : vector<8x256xf32>, i32 -> vector<8x256xf32>
    %c3 = arith.constant 3 : index
    %c0_28 = arith.constant 0 : index
    %c0_29 = arith.constant 0 : index
    %43 = vector.load %arg7[%c3, %c0_28, %c0_29] : memref<49x8x256xf32, #tpu.memory_space<vmem>>, vector<1x8x256xf32>
    %44 = vector.shape_cast %43 : vector<1x8x256xf32> to vector<8x256xf32>
    %45 = arith.mulf %44, %42 : vector<8x256xf32>
    %46 = arith.addf %41, %45 : vector<8x256xf32>
    %c47_i32 = arith.constant 47 : i32
    %47 = tpu.dynamic_rotate %23 by %c47_i32 dim 1 : vector<8x256xf32>, i32 -> vector<8x256xf32>
    %c4 = arith.constant 4 : index
    %c0_30 = arith.constant 0 : index
    %c0_31 = arith.constant 0 : index
    %48 = vector.load %arg7[%c4, %c0_30, %c0_31] : memref<49x8x256xf32, #tpu.memory_space<vmem>>, vector<1x8x256xf32>
    %49 = vector.shape_cast %48 : vector<1x8x256xf32> to vector<8x256xf32>
    %50 = arith.mulf %49, %47 : vector<8x256xf32>
    %51 = arith.addf %46, %50 : vector<8x256xf32>
    %c46_i32 = arith.constant 46 : i32
    %52 = tpu.dynamic_rotate %23 by %c46_i32 dim 1 : vector<8x256xf32>, i32 -> vector<8x256xf32>
    %c5 = arith.constant 5 : index
    %c0_32 = arith.constant 0 : index
    %c0_33 = arith.constant 0 : index
    %53 = vector.load %arg7[%c5, %c0_32, %c0_33] : memref<49x8x256xf32, #tpu.memory_space<vmem>>, vector<1x8x256xf32>
    %54 = vector.shape_cast %53 : vector<1x8x256xf32> to vector<8x256xf32>
    %55 = arith.mulf %54, %52 : vector<8x256xf32>
    %56 = arith.addf %51, %55 : vector<8x256xf32>
    %c45_i32 = arith.constant 45 : i32
    %57 = tpu.dynamic_rotate %23 by %c45_i32 dim 1 : vector<8x256xf32>, i32 -> vector<8x256xf32>
    %c6 = arith.constant 6 : index
    %c0_34 = arith.constant 0 : index
    %c0_35 = arith.constant 0 : index
    %58 = vector.load %arg7[%c6, %c0_34, %c0_35] : memref<49x8x256xf32, #tpu.memory_space<vmem>>, vector<1x8x256xf32>
    %59 = vector.shape_cast %58 : vector<1x8x256xf32> to vector<8x256xf32>
    %60 = arith.mulf %59, %57 : vector<8x256xf32>
    %61 = arith.addf %56, %60 : vector<8x256xf32>
    %c35_i32 = arith.constant 35 : i32
    %62 = tpu.dynamic_rotate %23 by %c35_i32 dim 1 : vector<8x256xf32>, i32 -> vector<8x256xf32>
    %c7 = arith.constant 7 : index
    %c0_36 = arith.constant 0 : index
    %c0_37 = arith.constant 0 : index
    %63 = vector.load %arg7[%c7, %c0_36, %c0_37] : memref<49x8x256xf32, #tpu.memory_space<vmem>>, vector<1x8x256xf32>
    %64 = vector.shape_cast %63 : vector<1x8x256xf32> to vector<8x256xf32>
    %65 = arith.mulf %64, %62 : vector<8x256xf32>
    %66 = arith.addf %61, %65 : vector<8x256xf32>
    %c34_i32 = arith.constant 34 : i32
    %67 = tpu.dynamic_rotate %23 by %c34_i32 dim 1 : vector<8x256xf32>, i32 -> vector<8x256xf32>
    %c8 = arith.constant 8 : index
    %c0_38 = arith.constant 0 : index
    %c0_39 = arith.constant 0 : index
    %68 = vector.load %arg7[%c8, %c0_38, %c0_39] : memref<49x8x256xf32, #tpu.memory_space<vmem>>, vector<1x8x256xf32>
    %69 = vector.shape_cast %68 : vector<1x8x256xf32> to vector<8x256xf32>
    %70 = arith.mulf %69, %67 : vector<8x256xf32>
    %71 = arith.addf %66, %70 : vector<8x256xf32>
    %c33_i32 = arith.constant 33 : i32
    %72 = tpu.dynamic_rotate %23 by %c33_i32 dim 1 : vector<8x256xf32>, i32 -> vector<8x256xf32>
    %c9 = arith.constant 9 : index
    %c0_40 = arith.constant 0 : index
    %c0_41 = arith.constant 0 : index
    %73 = vector.load %arg7[%c9, %c0_40, %c0_41] : memref<49x8x256xf32, #tpu.memory_space<vmem>>, vector<1x8x256xf32>
    %74 = vector.shape_cast %73 : vector<1x8x256xf32> to vector<8x256xf32>
    %75 = arith.mulf %74, %72 : vector<8x256xf32>
    %76 = arith.addf %71, %75 : vector<8x256xf32>
    %c32_i32 = arith.constant 32 : i32
    %77 = tpu.dynamic_rotate %23 by %c32_i32 dim 1 : vector<8x256xf32>, i32 -> vector<8x256xf32>
    %c10 = arith.constant 10 : index
    %c0_42 = arith.constant 0 : index
    %c0_43 = arith.constant 0 : index
    %78 = vector.load %arg7[%c10, %c0_42, %c0_43] : memref<49x8x256xf32, #tpu.memory_space<vmem>>, vector<1x8x256xf32>
    %79 = vector.shape_cast %78 : vector<1x8x256xf32> to vector<8x256xf32>
    %80 = arith.mulf %79, %77 : vector<8x256xf32>
    %81 = arith.addf %76, %80 : vector<8x256xf32>
    %c31_i32 = arith.constant 31 : i32
    %82 = tpu.dynamic_rotate %23 by %c31_i32 dim 1 : vector<8x256xf32>, i32 -> vector<8x256xf32>
    %c11 = arith.constant 11 : index
    %c0_44 = arith.constant 0 : index
    %c0_45 = arith.constant 0 : index
    %83 = vector.load %arg7[%c11, %c0_44, %c0_45] : memref<49x8x256xf32, #tpu.memory_space<vmem>>, vector<1x8x256xf32>
    %84 = vector.shape_cast %83 : vector<1x8x256xf32> to vector<8x256xf32>
    %85 = arith.mulf %84, %82 : vector<8x256xf32>
    %86 = arith.addf %81, %85 : vector<8x256xf32>
    %c30_i32 = arith.constant 30 : i32
    %87 = tpu.dynamic_rotate %23 by %c30_i32 dim 1 : vector<8x256xf32>, i32 -> vector<8x256xf32>
    %c12 = arith.constant 12 : index
    %c0_46 = arith.constant 0 : index
    %c0_47 = arith.constant 0 : index
    %88 = vector.load %arg7[%c12, %c0_46, %c0_47] : memref<49x8x256xf32, #tpu.memory_space<vmem>>, vector<1x8x256xf32>
    %89 = vector.shape_cast %88 : vector<1x8x256xf32> to vector<8x256xf32>
    %90 = arith.mulf %89, %87 : vector<8x256xf32>
    %91 = arith.addf %86, %90 : vector<8x256xf32>
    %c29_i32 = arith.constant 29 : i32
    %92 = tpu.dynamic_rotate %23 by %c29_i32 dim 1 : vector<8x256xf32>, i32 -> vector<8x256xf32>
    %c13 = arith.constant 13 : index
    %c0_48 = arith.constant 0 : index
    %c0_49 = arith.constant 0 : index
    %93 = vector.load %arg7[%c13, %c0_48, %c0_49] : memref<49x8x256xf32, #tpu.memory_space<vmem>>, vector<1x8x256xf32>
    %94 = vector.shape_cast %93 : vector<1x8x256xf32> to vector<8x256xf32>
    %95 = arith.mulf %94, %92 : vector<8x256xf32>
    %96 = arith.addf %91, %95 : vector<8x256xf32>
    %c19_i32 = arith.constant 19 : i32
    %97 = tpu.dynamic_rotate %23 by %c19_i32 dim 1 : vector<8x256xf32>, i32 -> vector<8x256xf32>
    %c14 = arith.constant 14 : index
    %c0_50 = arith.constant 0 : index
    %c0_51 = arith.constant 0 : index
    %98 = vector.load %arg7[%c14, %c0_50, %c0_51] : memref<49x8x256xf32, #tpu.memory_space<vmem>>, vector<1x8x256xf32>
    %99 = vector.shape_cast %98 : vector<1x8x256xf32> to vector<8x256xf32>
    %100 = arith.mulf %99, %97 : vector<8x256xf32>
    %101 = arith.addf %96, %100 : vector<8x256xf32>
    %c18_i32 = arith.constant 18 : i32
    %102 = tpu.dynamic_rotate %23 by %c18_i32 dim 1 : vector<8x256xf32>, i32 -> vector<8x256xf32>
    %c15 = arith.constant 15 : index
    %c0_52 = arith.constant 0 : index
    %c0_53 = arith.constant 0 : index
    %103 = vector.load %arg7[%c15, %c0_52, %c0_53] : memref<49x8x256xf32, #tpu.memory_space<vmem>>, vector<1x8x256xf32>
    %104 = vector.shape_cast %103 : vector<1x8x256xf32> to vector<8x256xf32>
    %105 = arith.mulf %104, %102 : vector<8x256xf32>
    %106 = arith.addf %101, %105 : vector<8x256xf32>
    %c17_i32 = arith.constant 17 : i32
    %107 = tpu.dynamic_rotate %23 by %c17_i32 dim 1 : vector<8x256xf32>, i32 -> vector<8x256xf32>
    %c16 = arith.constant 16 : index
    %c0_54 = arith.constant 0 : index
    %c0_55 = arith.constant 0 : index
    %108 = vector.load %arg7[%c16, %c0_54, %c0_55] : memref<49x8x256xf32, #tpu.memory_space<vmem>>, vector<1x8x256xf32>
    %109 = vector.shape_cast %108 : vector<1x8x256xf32> to vector<8x256xf32>
    %110 = arith.mulf %109, %107 : vector<8x256xf32>
    %111 = arith.addf %106, %110 : vector<8x256xf32>
    %c16_i32 = arith.constant 16 : i32
    %112 = tpu.dynamic_rotate %23 by %c16_i32 dim 1 : vector<8x256xf32>, i32 -> vector<8x256xf32>
    %c17 = arith.constant 17 : index
    %c0_56 = arith.constant 0 : index
    %c0_57 = arith.constant 0 : index
    %113 = vector.load %arg7[%c17, %c0_56, %c0_57] : memref<49x8x256xf32, #tpu.memory_space<vmem>>, vector<1x8x256xf32>
    %114 = vector.shape_cast %113 : vector<1x8x256xf32> to vector<8x256xf32>
    %115 = arith.mulf %114, %112 : vector<8x256xf32>
    %116 = arith.addf %111, %115 : vector<8x256xf32>
    %c15_i32 = arith.constant 15 : i32
    %117 = tpu.dynamic_rotate %23 by %c15_i32 dim 1 : vector<8x256xf32>, i32 -> vector<8x256xf32>
    %c18 = arith.constant 18 : index
    %c0_58 = arith.constant 0 : index
    %c0_59 = arith.constant 0 : index
    %118 = vector.load %arg7[%c18, %c0_58, %c0_59] : memref<49x8x256xf32, #tpu.memory_space<vmem>>, vector<1x8x256xf32>
    %119 = vector.shape_cast %118 : vector<1x8x256xf32> to vector<8x256xf32>
    %120 = arith.mulf %119, %117 : vector<8x256xf32>
    %121 = arith.addf %116, %120 : vector<8x256xf32>
    %c14_i32 = arith.constant 14 : i32
    %122 = tpu.dynamic_rotate %23 by %c14_i32 dim 1 : vector<8x256xf32>, i32 -> vector<8x256xf32>
    %c19 = arith.constant 19 : index
    %c0_60 = arith.constant 0 : index
    %c0_61 = arith.constant 0 : index
    %123 = vector.load %arg7[%c19, %c0_60, %c0_61] : memref<49x8x256xf32, #tpu.memory_space<vmem>>, vector<1x8x256xf32>
    %124 = vector.shape_cast %123 : vector<1x8x256xf32> to vector<8x256xf32>
    %125 = arith.mulf %124, %122 : vector<8x256xf32>
    %126 = arith.addf %121, %125 : vector<8x256xf32>
    %c13_i32 = arith.constant 13 : i32
    %127 = tpu.dynamic_rotate %23 by %c13_i32 dim 1 : vector<8x256xf32>, i32 -> vector<8x256xf32>
    %c20 = arith.constant 20 : index
    %c0_62 = arith.constant 0 : index
    %c0_63 = arith.constant 0 : index
    %128 = vector.load %arg7[%c20, %c0_62, %c0_63] : memref<49x8x256xf32, #tpu.memory_space<vmem>>, vector<1x8x256xf32>
    %129 = vector.shape_cast %128 : vector<1x8x256xf32> to vector<8x256xf32>
    %130 = arith.mulf %129, %127 : vector<8x256xf32>
    %131 = arith.addf %126, %130 : vector<8x256xf32>
    %c3_i32 = arith.constant 3 : i32
    %132 = tpu.dynamic_rotate %23 by %c3_i32 dim 1 : vector<8x256xf32>, i32 -> vector<8x256xf32>
    %c21 = arith.constant 21 : index
    %c0_64 = arith.constant 0 : index
    %c0_65 = arith.constant 0 : index
    %133 = vector.load %arg7[%c21, %c0_64, %c0_65] : memref<49x8x256xf32, #tpu.memory_space<vmem>>, vector<1x8x256xf32>
    %134 = vector.shape_cast %133 : vector<1x8x256xf32> to vector<8x256xf32>
    %135 = arith.mulf %134, %132 : vector<8x256xf32>
    %136 = arith.addf %131, %135 : vector<8x256xf32>
    %c2_i32 = arith.constant 2 : i32
    %137 = tpu.dynamic_rotate %23 by %c2_i32 dim 1 : vector<8x256xf32>, i32 -> vector<8x256xf32>
    %c22 = arith.constant 22 : index
    %c0_66 = arith.constant 0 : index
    %c0_67 = arith.constant 0 : index
    %138 = vector.load %arg7[%c22, %c0_66, %c0_67] : memref<49x8x256xf32, #tpu.memory_space<vmem>>, vector<1x8x256xf32>
    %139 = vector.shape_cast %138 : vector<1x8x256xf32> to vector<8x256xf32>
    %140 = arith.mulf %139, %137 : vector<8x256xf32>
    %141 = arith.addf %136, %140 : vector<8x256xf32>
    %c1_i32 = arith.constant 1 : i32
    %142 = tpu.dynamic_rotate %23 by %c1_i32 dim 1 : vector<8x256xf32>, i32 -> vector<8x256xf32>
    %c23 = arith.constant 23 : index
    %c0_68 = arith.constant 0 : index
    %c0_69 = arith.constant 0 : index
    %143 = vector.load %arg7[%c23, %c0_68, %c0_69] : memref<49x8x256xf32, #tpu.memory_space<vmem>>, vector<1x8x256xf32>
    %144 = vector.shape_cast %143 : vector<1x8x256xf32> to vector<8x256xf32>
    %145 = arith.mulf %144, %142 : vector<8x256xf32>
    %146 = arith.addf %141, %145 : vector<8x256xf32>
    %c255_i32 = arith.constant 255 : i32
    %147 = tpu.dynamic_rotate %23 by %c255_i32 dim 1 : vector<8x256xf32>, i32 -> vector<8x256xf32>
    %c25 = arith.constant 25 : index
    %c0_70 = arith.constant 0 : index
    %c0_71 = arith.constant 0 : index
    %148 = vector.load %arg7[%c25, %c0_70, %c0_71] : memref<49x8x256xf32, #tpu.memory_space<vmem>>, vector<1x8x256xf32>
    %149 = vector.shape_cast %148 : vector<1x8x256xf32> to vector<8x256xf32>
    %150 = arith.mulf %149, %147 : vector<8x256xf32>
    %151 = arith.addf %146, %150 : vector<8x256xf32>
    %c254_i32 = arith.constant 254 : i32
    %152 = tpu.dynamic_rotate %23 by %c254_i32 dim 1 : vector<8x256xf32>, i32 -> vector<8x256xf32>
    %c26 = arith.constant 26 : index
    %c0_72 = arith.constant 0 : index
    %c0_73 = arith.constant 0 : index
    %153 = vector.load %arg7[%c26, %c0_72, %c0_73] : memref<49x8x256xf32, #tpu.memory_space<vmem>>, vector<1x8x256xf32>
    %154 = vector.shape_cast %153 : vector<1x8x256xf32> to vector<8x256xf32>
    %155 = arith.mulf %154, %152 : vector<8x256xf32>
    %156 = arith.addf %151, %155 : vector<8x256xf32>
    %c253_i32 = arith.constant 253 : i32
    %157 = tpu.dynamic_rotate %23 by %c253_i32 dim 1 : vector<8x256xf32>, i32 -> vector<8x256xf32>
    %c27 = arith.constant 27 : index
    %c0_74 = arith.constant 0 : index
    %c0_75 = arith.constant 0 : index
    %158 = vector.load %arg7[%c27, %c0_74, %c0_75] : memref<49x8x256xf32, #tpu.memory_space<vmem>>, vector<1x8x256xf32>
    %159 = vector.shape_cast %158 : vector<1x8x256xf32> to vector<8x256xf32>
    %160 = arith.mulf %159, %157 : vector<8x256xf32>
    %161 = arith.addf %156, %160 : vector<8x256xf32>
    %c243_i32 = arith.constant 243 : i32
    %162 = tpu.dynamic_rotate %23 by %c243_i32 dim 1 : vector<8x256xf32>, i32 -> vector<8x256xf32>
    %c28 = arith.constant 28 : index
    %c0_76 = arith.constant 0 : index
    %c0_77 = arith.constant 0 : index
    %163 = vector.load %arg7[%c28, %c0_76, %c0_77] : memref<49x8x256xf32, #tpu.memory_space<vmem>>, vector<1x8x256xf32>
    %164 = vector.shape_cast %163 : vector<1x8x256xf32> to vector<8x256xf32>
    %165 = arith.mulf %164, %162 : vector<8x256xf32>
    %166 = arith.addf %161, %165 : vector<8x256xf32>
    %c242_i32 = arith.constant 242 : i32
    %167 = tpu.dynamic_rotate %23 by %c242_i32 dim 1 : vector<8x256xf32>, i32 -> vector<8x256xf32>
    %c29 = arith.constant 29 : index
    %c0_78 = arith.constant 0 : index
    %c0_79 = arith.constant 0 : index
    %168 = vector.load %arg7[%c29, %c0_78, %c0_79] : memref<49x8x256xf32, #tpu.memory_space<vmem>>, vector<1x8x256xf32>
    %169 = vector.shape_cast %168 : vector<1x8x256xf32> to vector<8x256xf32>
    %170 = arith.mulf %169, %167 : vector<8x256xf32>
    %171 = arith.addf %166, %170 : vector<8x256xf32>
    %c241_i32 = arith.constant 241 : i32
    %172 = tpu.dynamic_rotate %23 by %c241_i32 dim 1 : vector<8x256xf32>, i32 -> vector<8x256xf32>
    %c30 = arith.constant 30 : index
    %c0_80 = arith.constant 0 : index
    %c0_81 = arith.constant 0 : index
    %173 = vector.load %arg7[%c30, %c0_80, %c0_81] : memref<49x8x256xf32, #tpu.memory_space<vmem>>, vector<1x8x256xf32>
    %174 = vector.shape_cast %173 : vector<1x8x256xf32> to vector<8x256xf32>
    %175 = arith.mulf %174, %172 : vector<8x256xf32>
    %176 = arith.addf %171, %175 : vector<8x256xf32>
    %c240_i32 = arith.constant 240 : i32
    %177 = tpu.dynamic_rotate %23 by %c240_i32 dim 1 : vector<8x256xf32>, i32 -> vector<8x256xf32>
    %c31 = arith.constant 31 : index
    %c0_82 = arith.constant 0 : index
    %c0_83 = arith.constant 0 : index
    %178 = vector.load %arg7[%c31, %c0_82, %c0_83] : memref<49x8x256xf32, #tpu.memory_space<vmem>>, vector<1x8x256xf32>
    %179 = vector.shape_cast %178 : vector<1x8x256xf32> to vector<8x256xf32>
    %180 = arith.mulf %179, %177 : vector<8x256xf32>
    %181 = arith.addf %176, %180 : vector<8x256xf32>
    %c239_i32 = arith.constant 239 : i32
    %182 = tpu.dynamic_rotate %23 by %c239_i32 dim 1 : vector<8x256xf32>, i32 -> vector<8x256xf32>
    %c32 = arith.constant 32 : index
    %c0_84 = arith.constant 0 : index
    %c0_85 = arith.constant 0 : index
    %183 = vector.load %arg7[%c32, %c0_84, %c0_85] : memref<49x8x256xf32, #tpu.memory_space<vmem>>, vector<1x8x256xf32>
    %184 = vector.shape_cast %183 : vector<1x8x256xf32> to vector<8x256xf32>
    %185 = arith.mulf %184, %182 : vector<8x256xf32>
    %186 = arith.addf %181, %185 : vector<8x256xf32>
    %c238_i32 = arith.constant 238 : i32
    %187 = tpu.dynamic_rotate %23 by %c238_i32 dim 1 : vector<8x256xf32>, i32 -> vector<8x256xf32>
    %c33 = arith.constant 33 : index
    %c0_86 = arith.constant 0 : index
    %c0_87 = arith.constant 0 : index
    %188 = vector.load %arg7[%c33, %c0_86, %c0_87] : memref<49x8x256xf32, #tpu.memory_space<vmem>>, vector<1x8x256xf32>
    %189 = vector.shape_cast %188 : vector<1x8x256xf32> to vector<8x256xf32>
    %190 = arith.mulf %189, %187 : vector<8x256xf32>
    %191 = arith.addf %186, %190 : vector<8x256xf32>
    %c237_i32 = arith.constant 237 : i32
    %192 = tpu.dynamic_rotate %23 by %c237_i32 dim 1 : vector<8x256xf32>, i32 -> vector<8x256xf32>
    %c34 = arith.constant 34 : index
    %c0_88 = arith.constant 0 : index
    %c0_89 = arith.constant 0 : index
    %193 = vector.load %arg7[%c34, %c0_88, %c0_89] : memref<49x8x256xf32, #tpu.memory_space<vmem>>, vector<1x8x256xf32>
    %194 = vector.shape_cast %193 : vector<1x8x256xf32> to vector<8x256xf32>
    %195 = arith.mulf %194, %192 : vector<8x256xf32>
    %196 = arith.addf %191, %195 : vector<8x256xf32>
    %c227_i32 = arith.constant 227 : i32
    %197 = tpu.dynamic_rotate %23 by %c227_i32 dim 1 : vector<8x256xf32>, i32 -> vector<8x256xf32>
    %c35 = arith.constant 35 : index
    %c0_90 = arith.constant 0 : index
    %c0_91 = arith.constant 0 : index
    %198 = vector.load %arg7[%c35, %c0_90, %c0_91] : memref<49x8x256xf32, #tpu.memory_space<vmem>>, vector<1x8x256xf32>
    %199 = vector.shape_cast %198 : vector<1x8x256xf32> to vector<8x256xf32>
    %200 = arith.mulf %199, %197 : vector<8x256xf32>
    %201 = arith.addf %196, %200 : vector<8x256xf32>
    %c226_i32 = arith.constant 226 : i32
    %202 = tpu.dynamic_rotate %23 by %c226_i32 dim 1 : vector<8x256xf32>, i32 -> vector<8x256xf32>
    %c36 = arith.constant 36 : index
    %c0_92 = arith.constant 0 : index
    %c0_93 = arith.constant 0 : index
    %203 = vector.load %arg7[%c36, %c0_92, %c0_93] : memref<49x8x256xf32, #tpu.memory_space<vmem>>, vector<1x8x256xf32>
    %204 = vector.shape_cast %203 : vector<1x8x256xf32> to vector<8x256xf32>
    %205 = arith.mulf %204, %202 : vector<8x256xf32>
    %206 = arith.addf %201, %205 : vector<8x256xf32>
    %c225_i32 = arith.constant 225 : i32
    %207 = tpu.dynamic_rotate %23 by %c225_i32 dim 1 : vector<8x256xf32>, i32 -> vector<8x256xf32>
    %c37 = arith.constant 37 : index
    %c0_94 = arith.constant 0 : index
    %c0_95 = arith.constant 0 : index
    %208 = vector.load %arg7[%c37, %c0_94, %c0_95] : memref<49x8x256xf32, #tpu.memory_space<vmem>>, vector<1x8x256xf32>
    %209 = vector.shape_cast %208 : vector<1x8x256xf32> to vector<8x256xf32>
    %210 = arith.mulf %209, %207 : vector<8x256xf32>
    %211 = arith.addf %206, %210 : vector<8x256xf32>
    %c224_i32 = arith.constant 224 : i32
    %212 = tpu.dynamic_rotate %23 by %c224_i32 dim 1 : vector<8x256xf32>, i32 -> vector<8x256xf32>
    %c38 = arith.constant 38 : index
    %c0_96 = arith.constant 0 : index
    %c0_97 = arith.constant 0 : index
    %213 = vector.load %arg7[%c38, %c0_96, %c0_97] : memref<49x8x256xf32, #tpu.memory_space<vmem>>, vector<1x8x256xf32>
    %214 = vector.shape_cast %213 : vector<1x8x256xf32> to vector<8x256xf32>
    %215 = arith.mulf %214, %212 : vector<8x256xf32>
    %216 = arith.addf %211, %215 : vector<8x256xf32>
    %c223_i32 = arith.constant 223 : i32
    %217 = tpu.dynamic_rotate %23 by %c223_i32 dim 1 : vector<8x256xf32>, i32 -> vector<8x256xf32>
    %c39 = arith.constant 39 : index
    %c0_98 = arith.constant 0 : index
    %c0_99 = arith.constant 0 : index
    %218 = vector.load %arg7[%c39, %c0_98, %c0_99] : memref<49x8x256xf32, #tpu.memory_space<vmem>>, vector<1x8x256xf32>
    %219 = vector.shape_cast %218 : vector<1x8x256xf32> to vector<8x256xf32>
    %220 = arith.mulf %219, %217 : vector<8x256xf32>
    %221 = arith.addf %216, %220 : vector<8x256xf32>
    %c222_i32 = arith.constant 222 : i32
    %222 = tpu.dynamic_rotate %23 by %c222_i32 dim 1 : vector<8x256xf32>, i32 -> vector<8x256xf32>
    %c40 = arith.constant 40 : index
    %c0_100 = arith.constant 0 : index
    %c0_101 = arith.constant 0 : index
    %223 = vector.load %arg7[%c40, %c0_100, %c0_101] : memref<49x8x256xf32, #tpu.memory_space<vmem>>, vector<1x8x256xf32>
    %224 = vector.shape_cast %223 : vector<1x8x256xf32> to vector<8x256xf32>
    %225 = arith.mulf %224, %222 : vector<8x256xf32>
    %226 = arith.addf %221, %225 : vector<8x256xf32>
    %c221_i32 = arith.constant 221 : i32
    %227 = tpu.dynamic_rotate %23 by %c221_i32 dim 1 : vector<8x256xf32>, i32 -> vector<8x256xf32>
    %c41 = arith.constant 41 : index
    %c0_102 = arith.constant 0 : index
    %c0_103 = arith.constant 0 : index
    %228 = vector.load %arg7[%c41, %c0_102, %c0_103] : memref<49x8x256xf32, #tpu.memory_space<vmem>>, vector<1x8x256xf32>
    %229 = vector.shape_cast %228 : vector<1x8x256xf32> to vector<8x256xf32>
    %230 = arith.mulf %229, %227 : vector<8x256xf32>
    %231 = arith.addf %226, %230 : vector<8x256xf32>
    %c211_i32 = arith.constant 211 : i32
    %232 = tpu.dynamic_rotate %23 by %c211_i32 dim 1 : vector<8x256xf32>, i32 -> vector<8x256xf32>
    %c42 = arith.constant 42 : index
    %c0_104 = arith.constant 0 : index
    %c0_105 = arith.constant 0 : index
    %233 = vector.load %arg7[%c42, %c0_104, %c0_105] : memref<49x8x256xf32, #tpu.memory_space<vmem>>, vector<1x8x256xf32>
    %234 = vector.shape_cast %233 : vector<1x8x256xf32> to vector<8x256xf32>
    %235 = arith.mulf %234, %232 : vector<8x256xf32>
    %236 = arith.addf %231, %235 : vector<8x256xf32>
    %c210_i32 = arith.constant 210 : i32
    %237 = tpu.dynamic_rotate %23 by %c210_i32 dim 1 : vector<8x256xf32>, i32 -> vector<8x256xf32>
    %c43 = arith.constant 43 : index
    %c0_106 = arith.constant 0 : index
    %c0_107 = arith.constant 0 : index
    %238 = vector.load %arg7[%c43, %c0_106, %c0_107] : memref<49x8x256xf32, #tpu.memory_space<vmem>>, vector<1x8x256xf32>
    %239 = vector.shape_cast %238 : vector<1x8x256xf32> to vector<8x256xf32>
    %240 = arith.mulf %239, %237 : vector<8x256xf32>
    %241 = arith.addf %236, %240 : vector<8x256xf32>
    %c209_i32 = arith.constant 209 : i32
    %242 = tpu.dynamic_rotate %23 by %c209_i32 dim 1 : vector<8x256xf32>, i32 -> vector<8x256xf32>
    %c44 = arith.constant 44 : index
    %c0_108 = arith.constant 0 : index
    %c0_109 = arith.constant 0 : index
    %243 = vector.load %arg7[%c44, %c0_108, %c0_109] : memref<49x8x256xf32, #tpu.memory_space<vmem>>, vector<1x8x256xf32>
    %244 = vector.shape_cast %243 : vector<1x8x256xf32> to vector<8x256xf32>
    %245 = arith.mulf %244, %242 : vector<8x256xf32>
    %246 = arith.addf %241, %245 : vector<8x256xf32>
    %c208_i32 = arith.constant 208 : i32
    %247 = tpu.dynamic_rotate %23 by %c208_i32 dim 1 : vector<8x256xf32>, i32 -> vector<8x256xf32>
    %c45 = arith.constant 45 : index
    %c0_110 = arith.constant 0 : index
    %c0_111 = arith.constant 0 : index
    %248 = vector.load %arg7[%c45, %c0_110, %c0_111] : memref<49x8x256xf32, #tpu.memory_space<vmem>>, vector<1x8x256xf32>
    %249 = vector.shape_cast %248 : vector<1x8x256xf32> to vector<8x256xf32>
    %250 = arith.mulf %249, %247 : vector<8x256xf32>
    %251 = arith.addf %246, %250 : vector<8x256xf32>
    %c207_i32 = arith.constant 207 : i32
    %252 = tpu.dynamic_rotate %23 by %c207_i32 dim 1 : vector<8x256xf32>, i32 -> vector<8x256xf32>
    %c46 = arith.constant 46 : index
    %c0_112 = arith.constant 0 : index
    %c0_113 = arith.constant 0 : index
    %253 = vector.load %arg7[%c46, %c0_112, %c0_113] : memref<49x8x256xf32, #tpu.memory_space<vmem>>, vector<1x8x256xf32>
    %254 = vector.shape_cast %253 : vector<1x8x256xf32> to vector<8x256xf32>
    %255 = arith.mulf %254, %252 : vector<8x256xf32>
    %256 = arith.addf %251, %255 : vector<8x256xf32>
    %c206_i32 = arith.constant 206 : i32
    %257 = tpu.dynamic_rotate %23 by %c206_i32 dim 1 : vector<8x256xf32>, i32 -> vector<8x256xf32>
    %c47 = arith.constant 47 : index
    %c0_114 = arith.constant 0 : index
    %c0_115 = arith.constant 0 : index
    %258 = vector.load %arg7[%c47, %c0_114, %c0_115] : memref<49x8x256xf32, #tpu.memory_space<vmem>>, vector<1x8x256xf32>
    %259 = vector.shape_cast %258 : vector<1x8x256xf32> to vector<8x256xf32>
    %260 = arith.mulf %259, %257 : vector<8x256xf32>
    %261 = arith.addf %256, %260 : vector<8x256xf32>
    %c205_i32 = arith.constant 205 : i32
    %262 = tpu.dynamic_rotate %23 by %c205_i32 dim 1 : vector<8x256xf32>, i32 -> vector<8x256xf32>
    %c48 = arith.constant 48 : index
    %c0_116 = arith.constant 0 : index
    %c0_117 = arith.constant 0 : index
    %263 = vector.load %arg7[%c48, %c0_116, %c0_117] : memref<49x8x256xf32, #tpu.memory_space<vmem>>, vector<1x8x256xf32>
    %264 = vector.shape_cast %263 : vector<1x8x256xf32> to vector<8x256xf32>
    %265 = arith.mulf %264, %262 : vector<8x256xf32>
    %266 = arith.addf %261, %265 : vector<8x256xf32>
    %c0_118 = arith.constant 0 : index
    %c0_119 = arith.constant 0 : index
    %267 = vector.load %arg6[%c0_118, %c0_119] : memref<8x8xf32, #tpu.memory_space<vmem>>, vector<8x8xf32>
    %cst_120 = arith.constant dense<0.000000e+00> : vector<8x256xf32>
    %268 = tpu.matmul %267, %266, %cst_120 {dimension_numbers = #tpu.dot_dimension_numbers<[1], [0], [0], [1], [0, 0, 1, 1], [], []>} : vector<8x8xf32>, vector<8x256xf32>, vector<8x256xf32> -> vector<8x256xf32>
    %269 = arith.addf %23, %268 : vector<8x256xf32>
    %270 = vector.broadcast %18 : vector<8x1xf32> to vector<8x256xf32>
    %271 = arith.addf %269, %270 : vector<8x256xf32>
    %cst_121 = arith.constant 5.000000e-01 : f32
    %272 = vector.broadcast %cst_121 : f32 to vector<8x256xf32>
    %273 = arith.mulf %272, %271 : vector<8x256xf32>
    %cst_122 = arith.constant 0.707106769 : f32
    %274 = vector.broadcast %cst_122 : f32 to vector<8x256xf32>
    %275 = arith.mulf %271, %274 : vector<8x256xf32>
    %cst_123 = arith.constant 0.000000e+00 : f32
    %276 = vector.broadcast %cst_123 : f32 to vector<8x256xf32>
    %277 = arith.cmpf oge, %275, %276 : vector<8x256xf32>
    %cst_124 = arith.constant 1.000000e+00 : f32
    %cst_125 = arith.constant -1.000000e+00 : f32
    %278 = vector.broadcast %cst_124 : f32 to vector<8x256xf32>
    %279 = vector.broadcast %cst_125 : f32 to vector<8x256xf32>
    %280 = arith.select %277, %278, %279 : vector<8x256xi1>, vector<8x256xf32>
    %281 = math.absf %275 : vector<8x256xf32>
    %cst_126 = arith.constant 0.327591091 : f32
    %282 = vector.broadcast %cst_126 : f32 to vector<8x256xf32>
    %283 = arith.mulf %282, %281 : vector<8x256xf32>
    %cst_127 = arith.constant 1.000000e+00 : f32
    %284 = vector.broadcast %cst_127 : f32 to vector<8x256xf32>
    %285 = arith.addf %284, %283 : vector<8x256xf32>
    %cst_128 = arith.constant 1.000000e+00 : f32
    %286 = vector.broadcast %cst_128 : f32 to vector<8x256xf32>
    %287 = arith.divf %286, %285 : vector<8x256xf32>
    %cst_129 = arith.constant 1.06140542 : f32
    %288 = vector.broadcast %cst_129 : f32 to vector<8x256xf32>
    %289 = arith.mulf %288, %287 : vector<8x256xf32>
    %cst_130 = arith.constant -1.45315206 : f32
    %290 = vector.broadcast %cst_130 : f32 to vector<8x256xf32>
    %291 = arith.addf %289, %290 : vector<8x256xf32>
    %292 = arith.mulf %291, %287 : vector<8x256xf32>
    %cst_131 = arith.constant 1.42141378 : f32
    %293 = vector.broadcast %cst_131 : f32 to vector<8x256xf32>
    %294 = arith.addf %292, %293 : vector<8x256xf32>
    %295 = arith.mulf %294, %287 : vector<8x256xf32>
    %cst_132 = arith.constant -0.284496725 : f32
    %296 = vector.broadcast %cst_132 : f32 to vector<8x256xf32>
    %297 = arith.addf %295, %296 : vector<8x256xf32>
    %298 = arith.mulf %297, %287 : vector<8x256xf32>
    %cst_133 = arith.constant 0.254829586 : f32
    %299 = vector.broadcast %cst_133 : f32 to vector<8x256xf32>
    %300 = arith.addf %298, %299 : vector<8x256xf32>
    %301 = arith.mulf %300, %287 : vector<8x256xf32>
    %cst_134 = arith.constant 0.000000e+00 : f32
    %302 = vector.broadcast %cst_134 : f32 to vector<8x256xf32>
    %303 = arith.subf %302, %281 : vector<8x256xf32>
    %304 = arith.mulf %303, %281 : vector<8x256xf32>
    %305 = math.exp %304 : vector<8x256xf32>
    %306 = arith.mulf %301, %305 : vector<8x256xf32>
    %cst_135 = arith.constant 1.000000e+00 : f32
    %307 = vector.broadcast %cst_135 : f32 to vector<8x256xf32>
    %308 = arith.subf %307, %306 : vector<8x256xf32>
    %309 = arith.mulf %280, %308 : vector<8x256xf32>
    %cst_136 = arith.constant 1.000000e+00 : f32
    %310 = vector.broadcast %cst_136 : f32 to vector<8x256xf32>
    %311 = arith.addf %310, %309 : vector<8x256xf32>
    %312 = arith.mulf %273, %311 : vector<8x256xf32>
    %cst_137 = arith.constant dense<0.000000e+00> : vector<256x128xf32>
    %313 = tpu.matmul %312, %2, %cst_137 {dimension_numbers = #tpu.dot_dimension_numbers<[0], [0], [1], [1], [0, 1, 1, 1], [], []>} : vector<8x256xf32>, vector<8x128xf32>, vector<256x128xf32> -> vector<256x128xf32>
    %314 = vector.broadcast %3 : vector<1x128xf32> to vector<256x128xf32>
    %315 = arith.addf %313, %314 : vector<256x128xf32>
    %c0_138 = arith.constant 0 : index
    %c64 = arith.constant 64 : index
    %c0_139 = arith.constant 0 : index
    %316 = vector.load %arg10[%c0_138, %c64, %c0_139] : memref<1x320x128xf32, #tpu.memory_space<vmem>>, vector<1x256x128xf32>
    %317 = vector.shape_cast %316 : vector<1x256x128xf32> to vector<256x128xf32>
    %318 = vector.shape_cast %315 : vector<256x128xf32> to vector<1x256x128xf32>
    tpu.vector_store %arg10[%c0_138, %c64, %c0_139], %318 {strides = array<i32>} : memref<1x320x128xf32, #tpu.memory_space<vmem>>, vector<1x256x128xf32>,
    return
  }
  func.func @transform_0(%arg0: i32) -> (i32, i32, i32) {
    %c0_i32 = arith.constant 0 : i32
    %c0_i32_0 = arith.constant 0 : i32
    %c0_i32_1 = arith.constant 0 : i32
    return %arg0, %c0_i32, %c0_i32_0 : i32, i32, i32
  }
  func.func @transform_1(%arg0: i32) -> (i32, i32) {
    %c0_i32 = arith.constant 0 : i32
    %c0_i32_0 = arith.constant 0 : i32
    %c0_i32_1 = arith.constant 0 : i32
    return %c0_i32, %c0_i32_0 : i32, i32
  }
  func.func @transform_2(%arg0: i32) -> (i32, i32) {
    %c0_i32 = arith.constant 0 : i32
    %c0_i32_0 = arith.constant 0 : i32
    %c0_i32_1 = arith.constant 0 : i32
    return %c0_i32, %c0_i32_0 : i32, i32
  }
  func.func @transform_3(%arg0: i32) -> (i32, i32) {
    %c0_i32 = arith.constant 0 : i32
    %c0_i32_0 = arith.constant 0 : i32
    %c0_i32_1 = arith.constant 0 : i32
    return %c0_i32, %c0_i32_0 : i32, i32
  }
  func.func @transform_4(%arg0: i32) -> (i32, i32) {
    %c0_i32 = arith.constant 0 : i32
    %c0_i32_0 = arith.constant 0 : i32
    %c0_i32_1 = arith.constant 0 : i32
    return %c0_i32, %c0_i32_0 : i32, i32
  }
  func.func @transform_5(%arg0: i32) -> (i32, i32) {
    %c0_i32 = arith.constant 0 : i32
    %c0_i32_0 = arith.constant 0 : i32
    %c0_i32_1 = arith.constant 0 : i32
    return %c0_i32, %c0_i32_0 : i32, i32
  }
  func.func @transform_6(%arg0: i32) -> (i32, i32, i32) {
    %c0_i32 = arith.constant 0 : i32
    %c0_i32_0 = arith.constant 0 : i32
    %c0_i32_1 = arith.constant 0 : i32
    %c0_i32_2 = arith.constant 0 : i32
    return %c0_i32, %c0_i32_0, %c0_i32_1 : i32, i32, i32
  }
  func.func @transform_7(%arg0: i32) -> (i32, i32) {
    %c0_i32 = arith.constant 0 : i32
    %c0_i32_0 = arith.constant 0 : i32
    %c0_i32_1 = arith.constant 0 : i32
    return %c0_i32, %c0_i32_0 : i32, i32
  }
  func.func @transform_8(%arg0: i32) -> (i32, i32) {
    %c0_i32 = arith.constant 0 : i32
    %c0_i32_0 = arith.constant 0 : i32
    %c0_i32_1 = arith.constant 0 : i32
    return %c0_i32, %c0_i32_0 : i32, i32
  }
  func.func @transform_9(%arg0: i32) -> (i32, i32, i32) {
    %c0_i32 = arith.constant 0 : i32
    %c0_i32_0 = arith.constant 0 : i32
    %c0_i32_1 = arith.constant 0 : i32
    return %arg0, %c0_i32, %c0_i32_0 : i32, i32, i32
  }
}

</mosaic_0001>

<llo_original>
// kernel: bi_adapter_lsa.1
$region0: #{bi_adapter_lsa.1}
  #allocation0 [shape = 'u32[]', space=smem, size = 0x4, offset = 0x4, fixed_abs, tag = 'smem constant byte address 0x4 - core index']
  #allocation1 [shape = 'u32[144,128]{1,0:T(1,128)}', space=vmem, size = 0x12000, scoped, tag = 'internal scratch']
  %s0 = inlined_call_operand.vmem [shape: f32[2,320,128], index: 0, kind: input, shape index: {}]
  %s1 = inlined_call_operand.vmem [shape: f32[8,128], index: 1, kind: input, shape index: {}]
  %s2 = inlined_call_operand.vmem [shape: f32[1,8], index: 2, kind: input, shape index: {}]
  %s3 = inlined_call_operand.vmem [shape: f32[8,128], index: 3, kind: input, shape index: {}]
  %s4 = inlined_call_operand.vmem [shape: f32[8,2], index: 4, kind: input, shape index: {}]
  %s5 = inlined_call_operand.vmem [shape: f32[8,8], index: 5, kind: input, shape index: {}]
  %s6 = inlined_call_operand.vmem [shape: f32[49,8,256], index: 6, kind: input, shape index: {}]
  %s7 = inlined_call_operand.vmem [shape: f32[8,128], index: 7, kind: input, shape index: {}]
  %s8 = inlined_call_operand.vmem [shape: f32[1,128], index: 8, kind: input, shape index: {}]
  %s9 = inlined_call_operand.hbm [shape: f32[2,320,128], index: 9, kind: output, shape index: {}]
  %s10 = sld [smem:[#allocation0]]
  $region69: #{bi_adapter_lsa.1} parent=0
    _
  %s12 = ssub.s32 1, %s10
  %s13 = scalar_select 0, %s12, %s10
  $region1: #{bi_adapter_lsa.1} parent=0
    #allocation2 [shape = 'u8[327680]{0}', space=vmem, size = 0x50000, scoped, tag = 'output window, operand 0']
    #allocation3 [shape = 's32[2]{0}', space=sflag, size = 0x8, scoped, tag = 'scoped memory for bi_adapter_lsa.1']
    %14 = vsyncpa [#allocation3], 0
    %s15 = scalar_lea.sflag [#allocation3], 1
    %16 = vsyncpa %s15, 0
    loop: start=0, step=1, limit=4
    $region2: #{bi_adapter_lsa.1} parent=1 // loop_pre_header
      _
    $region3: #{bi_adapter_lsa.1} parent=1 // loop_header
      %s18 = sphi 0, %s22
      %p19 = scmp.ge.s32.totalorder %s18, 4
      %s28 = sphi 0, %s30
      %s31 = sphi 0, %s28
      %s32 = sphi 0, %s31
      %s48 = sphi 0, %s32
      %s52 = sphi 0, %s52
      %s54 = sphi 0, %s52
      %s55 = sphi 0, %s54
      %s69 = sphi 0, %s55
      %s73 = sphi 0, %s73
      %s75 = sphi 0, %s73
      %s76 = sphi 0, %s75
      %s90 = sphi 0, %s76
      %s94 = sphi 0, %s94
      %s96 = sphi 0, %s94
      %s97 = sphi 0, %s96
      %s111 = sphi 0, %s97
      %s115 = sphi 0, %s115
      %s117 = sphi 0, %s115
      %s118 = sphi 0, %s117
      %s132 = sphi 0, %s118
      %s136 = sphi 0, %s136
      %s138 = sphi 0, %s136
      %s139 = sphi 0, %s138
      %s153 = sphi 0, %s139
      %s157 = sphi 0, %s157
      %s159 = sphi 0, %s157
      %s160 = sphi 0, %s159
      %s174 = sphi 0, %s160
      %s178 = sphi 0, %s178
      %s180 = sphi 0, %s178
      %s181 = sphi 0, %s180
      %s195 = sphi 0, %s181
      %s199 = sphi 0, %s199
      %s201 = sphi 0, %s199
      %s202 = sphi 0, %s201
      %s216 = sphi 0, %s202
      %s222 = sphi 0, %s224
      %s225 = sphi 0, %s222
      %s226 = sphi 0, %s225
      %s242 = sphi 0, %s226
    $region4: #{bi_adapter_lsa.1} parent=1 // loop_header_branch
      %21 = sbr.rel (%p19) target = $region8
    $region5: #{bi_adapter_lsa.1} parent=1 // loop_body
      %s23 = ssub.s32 %s18, 1
      %s24 = ssub.s32 %s18, 2
      %s25 = sadd.s32 %s18, 1
      %s26 = ssub.s32 %s18, %s25
      %p27 = scmp.eq.s32.totalorder %s26, 0
      %s29 = sadd.s32 %s28, 1
      %s30 = scalar_select %p27, %s28, %s29
      %p33 = pneg %p27
      %p34 = scmp.eq.s32.totalorder %s18, 1
      %p35 = por %p33, %p34
      %p36 = scmp.ne.s32.totalorder %s28, %s31
      %p37 = scmp.eq.s32.totalorder %s18, 0
      %p38 = por %p36, %p37
      %p39 = scmp.ne.s32.totalorder %s28, %s31
      %p40 = scmp.eq.s32.totalorder %s23, 1
      %p41 = por %p39, %p40
      %p42 = scmp.ne.s32.totalorder %s31, %s32
      %p43 = scmp.eq.s32.totalorder %s23, 0
      %p44 = por %p42, %p43
      %p45 = scmp.ne.s32.totalorder %s31, %s32
      %p46 = scmp.eq.s32.totalorder %s24, 1
      %p47 = por %p45, %p46
      %p49 = scmp.ne.s32.totalorder %s32, %s48
      %p50 = scmp.eq.s32.totalorder %s24, 0
      %p51 = por %p49, %p50
      %s53 = sadd.s32 %s52, 1
      %p56 = scmp.eq.s32.totalorder %s18, 1
      %p57 = scmp.ne.s32.totalorder %s52, %s54
      %p58 = scmp.eq.s32.totalorder %s18, 0
      %p59 = por %p57, %p58
      %p60 = scmp.ne.s32.totalorder %s52, %s54
      %p61 = scmp.eq.s32.totalorder %s23, 1
      %p62 = por %p60, %p61
      %p63 = scmp.ne.s32.totalorder %s54, %s55
      %p64 = scmp.eq.s32.totalorder %s23, 0
      %p65 = por %p63, %p64
      %p66 = scmp.ne.s32.totalorder %s54, %s55
      %p67 = scmp.eq.s32.totalorder %s24, 1
      %p68 = por %p66, %p67
      %p70 = scmp.ne.s32.totalorder %s55, %s69
      %p71 = scmp.eq.s32.totalorder %s24, 0
      %p72 = por %p70, %p71
      %s74 = sadd.s32 %s73, 1
      %p77 = scmp.eq.s32.totalorder %s18, 1
      %p78 = scmp.ne.s32.totalorder %s73, %s75
      %p79 = scmp.eq.s32.totalorder %s18, 0
      %p80 = por %p78, %p79
      %p81 = scmp.ne.s32.totalorder %s73, %s75
      %p82 = scmp.eq.s32.totalorder %s23, 1
      %p83 = por %p81, %p82
      %p84 = scmp.ne.s32.totalorder %s75, %s76
      %p85 = scmp.eq.s32.totalorder %s23, 0
      %p86 = por %p84, %p85
      %p87 = scmp.ne.s32.totalorder %s75, %s76
      %p88 = scmp.eq.s32.totalorder %s24, 1
      %p89 = por %p87, %p88
      %p91 = scmp.ne.s32.totalorder %s76, %s90
      %p92 = scmp.eq.s32.totalorder %s24, 0
      %p93 = por %p91, %p92
      %s95 = sadd.s32 %s94, 1
      %p98 = scmp.eq.s32.totalorder %s18, 1
      %p99 = scmp.ne.s32.totalorder %s94, %s96
      %p100 = scmp.eq.s32.totalorder %s18, 0
      %p101 = por %p99, %p100
      %p102 = scmp.ne.s32.totalorder %s94, %s96
      %p103 = scmp.eq.s32.totalorder %s23, 1
      %p104 = por %p102, %p103
      %p105 = scmp.ne.s32.totalorder %s96, %s97
      %p106 = scmp.eq.s32.totalorder %s23, 0
      %p107 = por %p105, %p106
      %p108 = scmp.ne.s32.totalorder %s96, %s97
      %p109 = scmp.eq.s32.totalorder %s24, 1
      %p110 = por %p108, %p109
      %p112 = scmp.ne.s32.totalorder %s97, %s111
      %p113 = scmp.eq.s32.totalorder %s24, 0
      %p114 = por %p112, %p113
      %s116 = sadd.s32 %s115, 1
      %p119 = scmp.eq.s32.totalorder %s18, 1
      %p120 = scmp.ne.s32.totalorder %s115, %s117
      %p121 = scmp.eq.s32.totalorder %s18, 0
      %p122 = por %p120, %p121
      %p123 = scmp.ne.s32.totalorder %s115, %s117
      %p124 = scmp.eq.s32.totalorder %s23, 1
      %p125 = por %p123, %p124
      %p126 = scmp.ne.s32.totalorder %s117, %s118
      %p127 = scmp.eq.s32.totalorder %s23, 0
      %p128 = por %p126, %p127
      %p129 = scmp.ne.s32.totalorder %s117, %s118
      %p130 = scmp.eq.s32.totalorder %s24, 1
      %p131 = por %p129, %p130
      %p133 = scmp.ne.s32.totalorder %s118, %s132
      %p134 = scmp.eq.s32.totalorder %s24, 0
      %p135 = por %p133, %p134
      %s137 = sadd.s32 %s136, 1
      %p140 = scmp.eq.s32.totalorder %s18, 1
      %p141 = scmp.ne.s32.totalorder %s136, %s138
      %p142 = scmp.eq.s32.totalorder %s18, 0
      %p143 = por %p141, %p142
      %p144 = scmp.ne.s32.totalorder %s136, %s138
      %p145 = scmp.eq.s32.totalorder %s23, 1
      %p146 = por %p144, %p145
      %p147 = scmp.ne.s32.totalorder %s138, %s139
      %p148 = scmp.eq.s32.totalorder %s23, 0
      %p149 = por %p147, %p148
      %p150 = scmp.ne.s32.totalorder %s138, %s139
      %p151 = scmp.eq.s32.totalorder %s24, 1
      %p152 = por %p150, %p151
      %p154 = scmp.ne.s32.totalorder %s139, %s153
      %p155 = scmp.eq.s32.totalorder %s24, 0
      %p156 = por %p154, %p155
      %s158 = sadd.s32 %s157, 1
      %p161 = scmp.eq.s32.totalorder %s18, 1
      %p162 = scmp.ne.s32.totalorder %s157, %s159
      %p163 = scmp.eq.s32.totalorder %s18, 0
      %p164 = por %p162, %p163
      %p165 = scmp.ne.s32.totalorder %s157, %s159
      %p166 = scmp.eq.s32.totalorder %s23, 1
      %p167 = por %p165, %p166
      %p168 = scmp.ne.s32.totalorder %s159, %s160
      %p169 = scmp.eq.s32.totalorder %s23, 0
      %p170 = por %p168, %p169
      %p171 = scmp.ne.s32.totalorder %s159, %s160
      %p172 = scmp.eq.s32.totalorder %s24, 1
      %p173 = por %p171, %p172
      %p175 = scmp.ne.s32.totalorder %s160, %s174
      %p176 = scmp.eq.s32.totalorder %s24, 0
      %p177 = por %p175, %p176
      %s179 = sadd.s32 %s178, 1
      %p182 = scmp.eq.s32.totalorder %s18, 1
      %p183 = scmp.ne.s32.totalorder %s178, %s180
      %p184 = scmp.eq.s32.totalorder %s18, 0
      %p185 = por %p183, %p184
      %p186 = scmp.ne.s32.totalorder %s178, %s180
      %p187 = scmp.eq.s32.totalorder %s23, 1
      %p188 = por %p186, %p187
      %p189 = scmp.ne.s32.totalorder %s180, %s181
      %p190 = scmp.eq.s32.totalorder %s23, 0
      %p191 = por %p189, %p190
      %p192 = scmp.ne.s32.totalorder %s180, %s181
      %p193 = scmp.eq.s32.totalorder %s24, 1
      %p194 = por %p192, %p193
      %p196 = scmp.ne.s32.totalorder %s181, %s195
      %p197 = scmp.eq.s32.totalorder %s24, 0
      %p198 = por %p196, %p197
      %s200 = sadd.s32 %s199, 1
      %p203 = scmp.eq.s32.totalorder %s18, 1
      %p204 = scmp.ne.s32.totalorder %s199, %s201
      %p205 = scmp.eq.s32.totalorder %s18, 0
      %p206 = por %p204, %p205
      %p207 = scmp.ne.s32.totalorder %s199, %s201
      %p208 = scmp.eq.s32.totalorder %s23, 1
      %p209 = por %p207, %p208
      %p210 = scmp.ne.s32.totalorder %s201, %s202
      %p211 = scmp.eq.s32.totalorder %s23, 0
      %p212 = por %p210, %p211
      %p213 = scmp.ne.s32.totalorder %s201, %s202
      %p214 = scmp.eq.s32.totalorder %s24, 1
      %p215 = por %p213, %p214
      %p217 = scmp.ne.s32.totalorder %s202, %s216
      %p218 = scmp.eq.s32.totalorder %s24, 0
      %p219 = por %p217, %p218
      %s220 = ssub.s32 %s18, %s25
      %p221 = scmp.eq.s32.totalorder %s220, 0
      %s223 = sadd.s32 %s222, 1
      %s224 = scalar_select %p221, %s222, %s223
      %p227 = pneg %p221
      %p228 = scmp.eq.s32.totalorder %s18, 1
      %p229 = por %p227, %p228
      %p230 = scmp.ne.s32.totalorder %s222, %s225
      %p231 = scmp.eq.s32.totalorder %s18, 0
      %p232 = por %p230, %p231
      %p233 = scmp.ne.s32.totalorder %s222, %s225
      %p234 = scmp.eq.s32.totalorder %s23, 1
      %p235 = por %p233, %p234
      %p236 = scmp.ne.s32.totalorder %s225, %s226
      %p237 = scmp.eq.s32.totalorder %s23, 0
      %p238 = por %p236, %p237
      %p239 = scmp.ne.s32.totalorder %s225, %s226
      %p240 = scmp.eq.s32.totalorder %s24, 1
      %p241 = por %p239, %p240
      %p243 = scmp.ne.s32.totalorder %s226, %s242
      %p244 = scmp.eq.s32.totalorder %s24, 0
      %p245 = por %p243, %p244
      %p246 = scmp.le.s32.totalorder 1, %s18
      %p247 = scmp.lt.s32.totalorder %s18, 3
      %p248 = pnand %p246, %p247
      %p249 = pneg %p248
      // Predicated region
      $region9: #{bi_adapter_lsa.1} parent=5 // pred_check
        _
      $region10: #{bi_adapter_lsa.1} parent=5 // pred_check_branch
        %251 = sbr.rel (%p248) target = $region12
      $region11: #{bi_adapter_lsa.1} parent=5 // pred_region
        %s252 = ssub.s32 %s18, 1
        // Predicated region
        $region13: #{bi_adapter_lsa.1} parent=11 // pred_check
          %p253 = pneg %p65
        $region14: #{bi_adapter_lsa.1} parent=11 // pred_check_branch
          %255 = sbr.rel (%p253) target = $region16
        $region15: #{bi_adapter_lsa.1} parent=11 // pred_region
          _
        $region16: #{bi_adapter_lsa.1} parent=11 // pred_fallthru
          _
        // Predicated region
        $region17: #{bi_adapter_lsa.1} parent=11 // pred_check
          %p256 = pneg %p86
        $region18: #{bi_adapter_lsa.1} parent=11 // pred_check_branch
          %258 = sbr.rel (%p256) target = $region20
        $region19: #{bi_adapter_lsa.1} parent=11 // pred_region
          _
        $region20: #{bi_adapter_lsa.1} parent=11 // pred_fallthru
          _
        // Predicated region
        $region21: #{bi_adapter_lsa.1} parent=11 // pred_check
          %p259 = pneg %p107
        $region22: #{bi_adapter_lsa.1} parent=11 // pred_check_branch
          %261 = sbr.rel (%p259) target = $region24
        $region23: #{bi_adapter_lsa.1} parent=11 // pred_region
          _
        $region24: #{bi_adapter_lsa.1} parent=11 // pred_fallthru
          _
        // Predicated region
        $region25: #{bi_adapter_lsa.1} parent=11 // pred_check
          %p262 = pneg %p128
        $region26: #{bi_adapter_lsa.1} parent=11 // pred_check_branch
          %264 = sbr.rel (%p262) target = $region28
        $region27: #{bi_adapter_lsa.1} parent=11 // pred_region
          _
        $region28: #{bi_adapter_lsa.1} parent=11 // pred_fallthru
          _
        // Predicated region
        $region29: #{bi_adapter_lsa.1} parent=11 // pred_check
          %p265 = pneg %p149
        $region30: #{bi_adapter_lsa.1} parent=11 // pred_check_branch
          %267 = sbr.rel (%p265) target = $region32
        $region31: #{bi_adapter_lsa.1} parent=11 // pred_region
          _
        $region32: #{bi_adapter_lsa.1} parent=11 // pred_fallthru
          _
        // Predicated region
        $region33: #{bi_adapter_lsa.1} parent=11 // pred_check
          %p268 = pneg %p170
        $region34: #{bi_adapter_lsa.1} parent=11 // pred_check_branch
          %270 = sbr.rel (%p268) target = $region36
        $region35: #{bi_adapter_lsa.1} parent=11 // pred_region
          _
        $region36: #{bi_adapter_lsa.1} parent=11 // pred_fallthru
          _
        // Predicated region
        $region37: #{bi_adapter_lsa.1} parent=11 // pred_check
          %p271 = pneg %p191
        $region38: #{bi_adapter_lsa.1} parent=11 // pred_check_branch
          %273 = sbr.rel (%p271) target = $region40
        $region39: #{bi_adapter_lsa.1} parent=11 // pred_region
          _
        $region40: #{bi_adapter_lsa.1} parent=11 // pred_fallthru
          _
        // Predicated region
        $region41: #{bi_adapter_lsa.1} parent=11 // pred_check
          %p274 = pneg %p212
        $region42: #{bi_adapter_lsa.1} parent=11 // pred_check_branch
          %276 = sbr.rel (%p274) target = $region44
        $region43: #{bi_adapter_lsa.1} parent=11 // pred_region
          _
        $region44: #{bi_adapter_lsa.1} parent=11 // pred_fallthru
          _
      $region12: #{bi_adapter_lsa.1} parent=5 // pred_fallthru
        _
      %p277 = scmp.lt.s32.totalorder %s18, 2
      // Predicated region
      $region45: #{bi_adapter_lsa.1} parent=5 // pred_check
        %p278 = pneg %p277
      $region46: #{bi_adapter_lsa.1} parent=5 // pred_check_branch
        %280 = sbr.rel (%p278) target = $region48
      $region47: #{bi_adapter_lsa.1} parent=5 // pred_region
        // Predicated region
        $region49: #{bi_adapter_lsa.1} parent=47 // pred_check
          %p281 = pneg %p38
        $region50: #{bi_adapter_lsa.1} parent=47 // pred_check_branch
          %283 = sbr.rel (%p281) target = $region52
        $region51: #{bi_adapter_lsa.1} parent=47 // pred_region
          %p284 = scmp.lt.s32.totalorder %s18, 1
          %s285 = scalar_select %p284, %s18, 1
          %s286 = smul.addr %s285, 40
          %s287 = smul.addr %s286, 8
          %s288 = scalar_lea.vmem %s0, %s287
        $region52: #{bi_adapter_lsa.1} parent=47 // pred_fallthru
          _
      $region48: #{bi_adapter_lsa.1} parent=5 // pred_fallthru
        _
      %p289 = scmp.le.s32.totalorder 1, %s18
      %p290 = scmp.lt.s32.totalorder %s18, 3
      %p291 = pnand %p289, %p290
      %p292 = pneg %p291
      // Predicated region
      $region53: #{bi_adapter_lsa.1} parent=5 // pred_check
        _
      $region54: #{bi_adapter_lsa.1} parent=5 // pred_check_branch
        %294 = sbr.rel (%p291) target = $region56
      $region55: #{bi_adapter_lsa.1} parent=5 // pred_region
        %s295 = ssub.s32 %s18, 1
        %p296 = scmp.lt.s32.totalorder %s23, 1
        %s297 = scalar_select %p296, %s23, 1
        %s298 = smul.addr %s297, 40
        %s299 = smul.addr %s298, 8
        %s300 = scalar_lea.vmem %s0, %s299
        %p301 = pneg %p44
        %p302 = pneg %p41
        %p303 = pneg %p65
        %p304 = pneg %p62
        %p305 = pneg %p86
        %p306 = pneg %p83
        %p307 = pneg %p107
        %p308 = pneg %p104
        %p309 = pneg %p128
        %p310 = pneg %p125
        %p311 = pneg %p149
        %p312 = pneg %p146
        %p313 = pneg %p170
        %p314 = pneg %p167
        %p315 = pneg %p191
        %p316 = pneg %p188
        %p317 = pneg %p212
        %p318 = pneg %p209
        %p319 = pneg %p238
        %p320 = pneg %p235
        %s321 = sand.u32 %s225, 1
        %s322 = scalar_lea.sflag [#allocation3], %s321
        %s323 = sand.u32 %s225, 1
        %s324 = smul.addr %s323, 320
        %s325 = scalar_lea.vmem [#allocation2], %s324
        %p326 = scmp.lt.s32.totalorder %s23, 1
        %s327 = scalar_select %p326, %s23, 1
        %s328 = smul.addr %s327, 40
        %s329 = smul.addr %s328, 8
        %s330 = scalar_lea.vmem %s0, %s329
        %v331 = vld [vmem:[%s330] sm:$0xff]
        %v332 = vld [vmem:[%s330 + $0x8] sm:$0xff]
        %v333 = vld [vmem:[%s330 + $0x10] sm:$0xff]
        %v334 = vld [vmem:[%s330 + $0x18] sm:$0xff]
        %v335 = vld [vmem:[%s330 + $0x20] sm:$0xff]
        %v336 = vld [vmem:[%s330 + $0x28] sm:$0xff]
        %v337 = vld [vmem:[%s330 + $0x30] sm:$0xff]
        %v338 = vld [vmem:[%s330 + $0x38] sm:$0xff]
        %v339 = vld [vmem:[%s330 + $0x40] sm:$0xff]
        %v340 = vld [vmem:[%s330 + $0x48] sm:$0xff]
        %v341 = vld [vmem:[%s330 + $0x50] sm:$0xff]
        %v342 = vld [vmem:[%s330 + $0x58] sm:$0xff]
        %v343 = vld [vmem:[%s330 + $0x60] sm:$0xff]
        %v344 = vld [vmem:[%s330 + $0x68] sm:$0xff]
        %v345 = vld [vmem:[%s330 + $0x70] sm:$0xff]
        %v346 = vld [vmem:[%s330 + $0x78] sm:$0xff]
        %v347 = vld [vmem:[%s330 + $0x80] sm:$0xff]
        %v348 = vld [vmem:[%s330 + $0x88] sm:$0xff]
        %v349 = vld [vmem:[%s330 + $0x90] sm:$0xff]
        %v350 = vld [vmem:[%s330 + $0x98] sm:$0xff]
        %v351 = vld [vmem:[%s330 + $0xa0] sm:$0xff]
        %v352 = vld [vmem:[%s330 + $0xa8] sm:$0xff]
        %v353 = vld [vmem:[%s330 + $0xb0] sm:$0xff]
        %v354 = vld [vmem:[%s330 + $0xb8] sm:$0xff]
        %v355 = vld [vmem:[%s330 + $0xc0] sm:$0xff]
        %v356 = vld [vmem:[%s330 + $0xc8] sm:$0xff]
        %v357 = vld [vmem:[%s330 + $0xd0] sm:$0xff]
        %v358 = vld [vmem:[%s330 + $0xd8] sm:$0xff]
        %v359 = vld [vmem:[%s330 + $0xe0] sm:$0xff]
        %v360 = vld [vmem:[%s330 + $0xe8] sm:$0xff]
        %v361 = vld [vmem:[%s330 + $0xf0] sm:$0xff]
        %v362 = vld [vmem:[%s330 + $0xf8] sm:$0xff]
        %v363 = vld [vmem:[%s330 + $0x100] sm:$0xff]
        %v364 = vld [vmem:[%s330 + $0x108] sm:$0xff]
        %v365 = vld [vmem:[%s330 + $0x110] sm:$0xff]
        %v366 = vld [vmem:[%s330 + $0x118] sm:$0xff]
        %v367 = vld [vmem:[%s330 + $0x120] sm:$0xff]
        %v368 = vld [vmem:[%s330 + $0x128] sm:$0xff]
        %v369 = vld [vmem:[%s330 + $0x130] sm:$0xff]
        %v370 = vld [vmem:[%s330 + $0x138] sm:$0xff]
        %v371 = vld [vmem:[%s7] sm:$0xff]
        %v372 = vld [vmem:[%s8] sm:$0x1]
        %v373 = vld [vmem:[%s1] sm:$0xff]
        %v374 = vld [vmem:[%s2] sm:$0x1]
        %v376 = vlaneseq
        %v377 = vshrl.u32 %v376, 7
        %v378 = vsub.s32 0, %v377
        %v379 = vrot.slane %v374, %v378
        %381 = vmatprep.subr.mxu0 0.0
        %382 = vmatpush1.xpose.msra.mxu0 %v373
        %383 = vmatprep.subr.mxu0 0.0
        %384 = vmatpush1.xpose.msra.mxu0 0.0
        %385 = vmatprep.subr.mxu0 0.0
        %386 = vmatpush1.xpose.msra.mxu0 0.0
        %387 = vmatprep.subr.mxu0 0.0
        %388 = vmatpush1.xpose.msra.mxu0 0.0
        %389 = vmatprep.subr.mxu0 0.0
        %390 = vmatpush1.xpose.msra.mxu0 0.0
        %391 = vmatprep.subr.mxu0 0.0
        %392 = vmatpush1.xpose.msra.mxu0 0.0
        %393 = vmatprep.subr.mxu0 0.0
        %394 = vmatpush1.xpose.msra.mxu0 0.0
        %395 = vmatprep.subr.mxu0 0.0
        %396 = vmatpush1.xpose.msra.mxu0 0.0
        %397 = vmatprep.subr.mxu0 0.0
        %398 = vmatpush1.xpose.msra.mxu0 0.0
        %399 = vmatprep.subr.mxu0 0.0
        %400 = vmatpush1.xpose.msra.mxu0 0.0
        %401 = vmatprep.subr.mxu0 0.0
        %402 = vmatpush1.xpose.msra.mxu0 0.0
        %403 = vmatprep.subr.mxu0 0.0
        %404 = vmatpush1.xpose.msra.mxu0 0.0
        %405 = vmatprep.subr.mxu0 0.0
        %406 = vmatpush1.xpose.msra.mxu0 0.0
        %407 = vmatprep.subr.mxu0 0.0
        %408 = vmatpush1.xpose.msra.mxu0 0.0
        %409 = vmatprep.subr.mxu0 0.0
        %410 = vmatpush1.xpose.msra.mxu0 0.0
        %411 = vmatprep.subr.mxu0 0.0
        %412 = vmatpush1.xpose.msra.mxu0 0.0
        %413 = vmatprep.subr.mxu0 0.0
        %414 = vmatpush1.xpose.msra.mxu0 0.0
        %415 = vmatprep.subr.mxu0 0.0
        %416 = vmatpush1.xpose.msra.mxu0 0.0
        %417 = vmatprep.subr.mxu0 0.0
        %418 = vmatpush1.xpose.msra.mxu0 0.0
        %419 = vmatprep.subr.mxu0 0.0
        %420 = vmatpush1.xpose.msra.mxu0 0.0
        %421 = vmatprep.subr.mxu0 0.0
        %422 = vmatpush1.xpose.msra.mxu0 0.0
        %423 = vmatprep.subr.mxu0 0.0
        %424 = vmatpush1.xpose.msra.mxu0 0.0
        %425 = vmatprep.subr.mxu0 0.0
        %426 = vmatpush1.xpose.msra.mxu0 0.0
        %427 = vmatprep.subr.mxu0 0.0
        %428 = vmatpush1.xpose.msra.mxu0 0.0
        %429 = vmatprep.subr.mxu0 0.0
        %430 = vmatpush1.xpose.msra.mxu0 0.0
        %431 = vmatprep.subr.mxu0 0.0
        %432 = vmatpush1.xpose.msra.mxu0 0.0
        %433 = vmatprep.subr.mxu0 0.0
        %434 = vmatpush1.xpose.msra.mxu0 0.0
        %435 = vmatprep.subr.mxu0 0.0
        %436 = vmatpush1.xpose.msra.mxu0 0.0
        %437 = vmatprep.subr.mxu0 0.0
        %438 = vmatpush1.xpose.msra.mxu0 0.0
        %439 = vmatprep.subr.mxu0 0.0
        %440 = vmatpush1.xpose.msra.mxu0 0.0
        %441 = vmatprep.subr.mxu0 0.0
        %442 = vmatpush1.xpose.msra.mxu0 0.0
        %443 = vmatprep.subr.mxu0 0.0
        %444 = vmatpush1.xpose.msra.mxu0 0.0
        %445 = vmatprep.mubr.f32.mxu0 0.0
        %446 = vmatmul.mubr.f32.gmra.mrb[0].mxu0 %v331
        %v447 = vpop.f32.mrb[0].mxu0
        %v448 = vadd.f32 %v379, %v447
        %v449 = vpop.f32.mrb[0].mxu0
        %450 = vmatprep.mubr.f32.mxu0 0.0
        %451 = vmatmul.mubr.f32.gmra.mrb[0].mxu0 %v332
        %v452 = vpop.f32.mrb[0].mxu0
        %v453 = vadd.f32 %v379, %v452
        %v454 = vpop.f32.mrb[0].mxu0
        %455 = vmatprep.mubr.f32.mxu0 0.0
        %456 = vmatmul.mubr.f32.gmra.mrb[0].mxu0 %v333
        %v457 = vpop.f32.mrb[0].mxu0
        %v458 = vadd.f32 %v379, %v457
        %v459 = vpop.f32.mrb[0].mxu0
        %460 = vmatprep.mubr.f32.mxu0 0.0
        %461 = vmatmul.mubr.f32.gmra.mrb[0].mxu0 %v334
        %v462 = vpop.f32.mrb[0].mxu0
        %v463 = vadd.f32 %v379, %v462
        %v464 = vpop.f32.mrb[0].mxu0
        %465 = vmatprep.mubr.f32.mxu0 0.0
        %466 = vmatmul.mubr.f32.gmra.mrb[0].mxu0 %v335
        %v467 = vpop.f32.mrb[0].mxu0
        %v468 = vadd.f32 %v379, %v467
        %v469 = vpop.f32.mrb[0].mxu0
        %470 = vmatprep.mubr.f32.mxu0 0.0
        %471 = vmatmul.mubr.f32.gmra.mrb[0].mxu0 %v336
        %v472 = vpop.f32.mrb[0].mxu0
        %v473 = vadd.f32 %v379, %v472
        %v474 = vpop.f32.mrb[0].mxu0
        %475 = vmatprep.mubr.f32.mxu0 0.0
        %476 = vmatmul.mubr.f32.gmra.mrb[0].mxu0 %v337
        %v477 = vpop.f32.mrb[0].mxu0
        %v478 = vadd.f32 %v379, %v477
        %v479 = vpop.f32.mrb[0].mxu0
        %480 = vmatprep.mubr.f32.mxu0 0.0
        %481 = vmatmul.mubr.f32.gmra.mrb[0].mxu0 %v338
        %v482 = vpop.f32.mrb[0].mxu0
        %v483 = vadd.f32 %v379, %v482
        %v484 = vpop.f32.mrb[0].mxu0
        %485 = vdwg.mxu0
        %v487 = vlaneseq
        %v488 = vshrl.u32 %v487, 7
        %v489 = vsub.s32 0, %v488
        %v490 = vrot.slane %v372, %v489
        %vm492 = vcmask 64512
        %v494 = vsel %vm492, %v448, 0
        %v497 = vsel %vm492, %v453, 0
        %v500 = vsel %vm492, %v458, 0
        %v503 = vsel %vm492, %v463, 0
        %v506 = vsel %vm492, %v468, 0
        %v509 = vsel %vm492, %v473, 0
        %v512 = vsel %vm492, %v478, 0
        %v515 = vsel %vm492, %v483, 0
        %517 = vmatprep.subr.mxu0 0.0
        %518 = vmatpush1.msra.mxu0 %v371
        %519 = vmatprep.subr.mxu0 0.0
        %520 = vmatpush1.msra.mxu0 0.0
        %521 = vmatprep.subr.mxu0 0.0
        %522 = vmatpush1.msra.mxu0 0.0
        %523 = vmatprep.subr.mxu0 0.0
        %524 = vmatpush1.msra.mxu0 0.0
        %525 = vmatprep.subr.mxu0 0.0
        %526 = vmatpush1.msra.mxu0 0.0
        %527 = vmatprep.subr.mxu0 0.0
        %528 = vmatpush1.msra.mxu0 0.0
        %529 = vmatprep.subr.mxu0 0.0
        %530 = vmatpush1.msra.mxu0 0.0
        %531 = vmatprep.subr.mxu0 0.0
        %532 = vmatpush1.msra.mxu0 0.0
        %533 = vmatprep.subr.mxu0 0.0
        %534 = vmatpush1.msra.mxu0 0.0
        %535 = vmatprep.subr.mxu0 0.0
        %536 = vmatpush1.msra.mxu0 0.0
        %537 = vmatprep.subr.mxu0 0.0
        %538 = vmatpush1.msra.mxu0 0.0
        %539 = vmatprep.subr.mxu0 0.0
        %540 = vmatpush1.msra.mxu0 0.0
        %541 = vmatprep.subr.mxu0 0.0
        %542 = vmatpush1.msra.mxu0 0.0
        %543 = vmatprep.subr.mxu0 0.0
        %544 = vmatpush1.msra.mxu0 0.0
        %545 = vmatprep.subr.mxu0 0.0
        %546 = vmatpush1.msra.mxu0 0.0
        %547 = vmatprep.subr.mxu0 0.0
        %548 = vmatpush1.msra.mxu0 0.0
        %549 = vmatprep.subr.mxu0 0.0
        %550 = vmatpush1.msra.mxu0 0.0
        %551 = vmatprep.subr.mxu0 0.0
        %552 = vmatpush1.msra.mxu0 0.0
        %553 = vmatprep.subr.mxu0 0.0
        %554 = vmatpush1.msra.mxu0 0.0
        %555 = vmatprep.subr.mxu0 0.0
        %556 = vmatpush1.msra.mxu0 0.0
        %557 = vmatprep.subr.mxu0 0.0
        %558 = vmatpush1.msra.mxu0 0.0
        %559 = vmatprep.subr.mxu0 0.0
        %560 = vmatpush1.msra.mxu0 0.0
        %561 = vmatprep.subr.mxu0 0.0
        %562 = vmatpush1.msra.mxu0 0.0
        %563 = vmatprep.subr.mxu0 0.0
        %564 = vmatpush1.msra.mxu0 0.0
        %565 = vmatprep.subr.mxu0 0.0
        %566 = vmatpush1.msra.mxu0 0.0
        %567 = vmatprep.subr.mxu0 0.0
        %568 = vmatpush1.msra.mxu0 0.0
        %569 = vmatprep.subr.mxu0 0.0
        %570 = vmatpush1.msra.mxu0 0.0
        %571 = vmatprep.subr.mxu0 0.0
        %572 = vmatpush1.msra.mxu0 0.0
        %573 = vmatprep.subr.mxu0 0.0
        %574 = vmatpush1.msra.mxu0 0.0
        %575 = vmatprep.subr.mxu0 0.0
        %576 = vmatpush1.msra.mxu0 0.0
        %577 = vmatprep.subr.mxu0 0.0
        %578 = vmatpush1.msra.mxu0 0.0
        %579 = vmatprep.subr.mxu0 0.0
        %580 = vmatpush1.msra.mxu0 0.0
        %581 = vmatprep.mubr.f32.mxu0 0.0
        %582 = vmatmul.mubr.f32.gmra.mrb[0].mxu0 %v494
        %v583 = vpop.f32.mrb[0].mxu0
        %v584 = vadd.f32 %v490, %v583
        %v585 = vpop.f32.mrb[0].mxu0
        %586 = vmatprep.mubr.f32.mxu0 0.0
        %587 = vmatmul.mubr.f32.gmra.mrb[0].mxu0 %v497
        %v588 = vpop.f32.mrb[0].mxu0
        %v589 = vadd.f32 %v490, %v588
        %v590 = vpop.f32.mrb[0].mxu0
        %591 = vmatprep.mubr.f32.mxu0 0.0
        %592 = vmatmul.mubr.f32.gmra.mrb[0].mxu0 %v500
        %v593 = vpop.f32.mrb[0].mxu0
        %v594 = vadd.f32 %v490, %v593
        %v595 = vpop.f32.mrb[0].mxu0
        %596 = vmatprep.mubr.f32.mxu0 0.0
        %597 = vmatmul.mubr.f32.gmra.mrb[0].mxu0 %v503
        %v598 = vpop.f32.mrb[0].mxu0
        %v599 = vadd.f32 %v490, %v598
        %v600 = vpop.f32.mrb[0].mxu0
        %601 = vmatprep.mubr.f32.mxu0 0.0
        %602 = vmatmul.mubr.f32.gmra.mrb[0].mxu0 %v506
        %v603 = vpop.f32.mrb[0].mxu0
        %v604 = vadd.f32 %v490, %v603
        %v605 = vpop.f32.mrb[0].mxu0
        %606 = vmatprep.mubr.f32.mxu0 0.0
        %607 = vmatmul.mubr.f32.gmra.mrb[0].mxu0 %v509
        %v608 = vpop.f32.mrb[0].mxu0
        %v609 = vadd.f32 %v490, %v608
        %v610 = vpop.f32.mrb[0].mxu0
        %611 = vmatprep.mubr.f32.mxu0 0.0
        %612 = vmatmul.mubr.f32.gmra.mrb[0].mxu0 %v512
        %v613 = vpop.f32.mrb[0].mxu0
        %v614 = vadd.f32 %v490, %v613
        %v615 = vpop.f32.mrb[0].mxu0
        %616 = vmatprep.mubr.f32.mxu0 0.0
        %617 = vmatmul.mubr.f32.gmra.mrb[0].mxu0 %v515
        %v618 = vpop.f32.mrb[0].mxu0
        %v619 = vadd.f32 %v490, %v618
        %v620 = vpop.f32.mrb[0].mxu0
        %621 = vdwg.mxu0
        %622 = vst [vmem:[%s325] sm:$0xff] %v584
        %623 = vst [vmem:[%s325 + $0x8] sm:$0xff] %v589
        %624 = vst [vmem:[%s325 + $0x10] sm:$0xff] %v594
        %625 = vst [vmem:[%s325 + $0x18] sm:$0xff] %v599
        %626 = vst [vmem:[%s325 + $0x20] sm:$0xff] %v604
        %627 = vst [vmem:[%s325 + $0x28] sm:$0xff] %v609
        %628 = vst [vmem:[%s325 + $0x30] sm:$0xff] %v614
        %629 = vst [vmem:[%s325 + $0x38] sm:$0xff] %v619
        %v630 = vld [vmem:[%s4] sm:$0xff]
        %v631 = vld [vmem:[%s3] sm:$0xff]
        %633 = vset.pattern.permute.xlu0 0
        %634 = vperm.xlu0 %633, %v630
        %v635 = vpop.permute.xlu0 %634
        %637 = vmatprep.subr.mxu0 0.0
        %638 = vmatpush1.xpose.msra.mxu0 %v339
        %639 = vmatprep.subr.mxu0 0.0
        %640 = vmatpush1.xpose.msra.mxu0 %v340
        %641 = vmatprep.subr.mxu0 0.0
        %642 = vmatpush1.xpose.msra.mxu0 %v341
        %643 = vmatprep.subr.mxu0 0.0
        %644 = vmatpush1.xpose.msra.mxu0 %v342
        %645 = vmatprep.subr.mxu0 0.0
        %646 = vmatpush1.xpose.msra.mxu0 %v343
        %647 = vmatprep.subr.mxu0 0.0
        %648 = vmatpush1.xpose.msra.mxu0 %v344
        %649 = vmatprep.subr.mxu0 0.0
        %650 = vmatpush1.xpose.msra.mxu0 %v345
        %651 = vmatprep.subr.mxu0 0.0
        %652 = vmatpush1.xpose.msra.mxu0 %v346
        %653 = vmatprep.subr.mxu0 0.0
        %654 = vmatpush1.xpose.msra.mxu0 %v347
        %655 = vmatprep.subr.mxu0 0.0
        %656 = vmatpush1.xpose.msra.mxu0 %v348
        %657 = vmatprep.subr.mxu0 0.0
        %658 = vmatpush1.xpose.msra.mxu0 %v349
        %659 = vmatprep.subr.mxu0 0.0
        %660 = vmatpush1.xpose.msra.mxu0 %v350
        %661 = vmatprep.subr.mxu0 0.0
        %662 = vmatpush1.xpose.msra.mxu0 %v351
        %663 = vmatprep.subr.mxu0 0.0
        %664 = vmatpush1.xpose.msra.mxu0 %v352
        %665 = vmatprep.subr.mxu0 0.0
        %666 = vmatpush1.xpose.msra.mxu0 %v353
        %667 = vmatprep.subr.mxu0 0.0
        %668 = vmatpush1.xpose.msra.mxu0 %v354
        %669 = vmatprep.subr.mxu0 0.0
        %670 = vmatpush1.xpose.msra.mxu0 %v355
        %671 = vmatprep.subr.mxu0 0.0
        %672 = vmatpush1.xpose.msra.mxu0 %v356
        %673 = vmatprep.subr.mxu0 0.0
        %674 = vmatpush1.xpose.msra.mxu0 %v357
        %675 = vmatprep.subr.mxu0 0.0
        %676 = vmatpush1.xpose.msra.mxu0 %v358
        %677 = vmatprep.subr.mxu0 0.0
        %678 = vmatpush1.xpose.msra.mxu0 %v359
        %679 = vmatprep.subr.mxu0 0.0
        %680 = vmatpush1.xpose.msra.mxu0 %v360
        %681 = vmatprep.subr.mxu0 0.0
        %682 = vmatpush1.xpose.msra.mxu0 %v361
        %683 = vmatprep.subr.mxu0 0.0
        %684 = vmatpush1.xpose.msra.mxu0 %v362
        %685 = vmatprep.subr.mxu0 0.0
        %686 = vmatpush1.xpose.msra.mxu0 %v363
        %687 = vmatprep.subr.mxu0 0.0
        %688 = vmatpush1.xpose.msra.mxu0 %v364
        %689 = vmatprep.subr.mxu0 0.0
        %690 = vmatpush1.xpose.msra.mxu0 %v365
        %691 = vmatprep.subr.mxu0 0.0
        %692 = vmatpush1.xpose.msra.mxu0 %v366
        %693 = vmatprep.subr.mxu0 0.0
        %694 = vmatpush1.xpose.msra.mxu0 %v367
        %695 = vmatprep.subr.mxu0 0.0
        %696 = vmatpush1.xpose.msra.mxu0 %v368
        %697 = vmatprep.subr.mxu0 0.0
        %698 = vmatpush1.xpose.msra.mxu0 %v369
        %699 = vmatprep.subr.mxu0 0.0
        %700 = vmatpush1.xpose.msra.mxu0 %v370
        %701 = vmatprep.mubr.f32.mxu0 0.0
        %702 = vmatmul.mubr.f32.gmra.mrb[0].mxu0 %v631
        %v703 = vpop.f32.mrb[0].mxu0
        %v704 = vadd.f32 %v635, %v703
        %v705 = vpop.f32.mrb[0].mxu0
        %v706 = vadd.f32 %v635, %v705
        %707 = vdwg.mxu0
        %s708 = scalar_lea.vmem %s6, 384
        %v709 = vld [vmem:[%s708] sm:$0xff]
        %v710 = vld [vmem:[%s708 + $0x8] sm:$0xff]
        %v711 = vmul.f32 %v709, %v704
        %v712 = vmul.f32 %v710, %v706
        %713 = vrot.lane.b32.xlu0 %v704, 51
        %v714 = vpop.permute.xlu0 %713
        %715 = vrot.lane.b32.xlu0 %v706, 51
        %v716 = vpop.permute.xlu0 %715
        %v717 = vlaneseq
        %v718 = vand.u32 %v717, 127
        %vm719 = vcmp.lt.s32.totalorder %v718, 51
        %v720 = vsel %vm719, %v714, %v716
        %v721 = vsel %vm719, %v716, %v714
        %v722 = vld [vmem:[%s6] sm:$0xff]
        %v723 = vld [vmem:[%s6 + $0x8] sm:$0xff]
        %v724 = vmul.f32 %v722, %v721
        %v725 = vmul.f32 %v723, %v720
        %v726 = vadd.f32 %v711, %v724
        %v727 = vadd.f32 %v712, %v725
        %728 = vrot.lane.b32.xlu0 %v704, 50
        %v729 = vpop.permute.xlu0 %728
        %730 = vrot.lane.b32.xlu0 %v706, 50
        %v731 = vpop.permute.xlu0 %730
        %vm732 = vcmp.lt.s32.totalorder %v718, 50
        %v733 = vsel %vm732, %v729, %v731
        %v734 = vsel %vm732, %v731, %v729
        %s735 = scalar_lea.vmem %s6, 16
        %v736 = vld [vmem:[%s735] sm:$0xff]
        %v737 = vld [vmem:[%s735 + $0x8] sm:$0xff]
        %v738 = vmul.f32 %v736, %v734
        %v739 = vmul.f32 %v737, %v733
        %v740 = vadd.f32 %v726, %v738
        %v741 = vadd.f32 %v727, %v739
        %742 = vrot.lane.b32.xlu0 %v704, 49
        %v743 = vpop.permute.xlu0 %742
        %744 = vrot.lane.b32.xlu0 %v706, 49
        %v745 = vpop.permute.xlu0 %744
        %vm746 = vcmp.lt.s32.totalorder %v718, 49
        %v747 = vsel %vm746, %v743, %v745
        %v748 = vsel %vm746, %v745, %v743
        %s749 = scalar_lea.vmem %s6, 32
        %v750 = vld [vmem:[%s749] sm:$0xff]
        %v751 = vld [vmem:[%s749 + $0x8] sm:$0xff]
        %v752 = vmul.f32 %v750, %v748
        %v753 = vmul.f32 %v751, %v747
        %v754 = vadd.f32 %v740, %v752
        %v755 = vadd.f32 %v741, %v753
        %756 = vrot.lane.b32.xlu0 %v704, 48
        %v757 = vpop.permute.xlu0 %756
        %758 = vrot.lane.b32.xlu0 %v706, 48
        %v759 = vpop.permute.xlu0 %758
        %vm760 = vcmp.lt.s32.totalorder %v718, 48
        %v761 = vsel %vm760, %v757, %v759
        %v762 = vsel %vm760, %v759, %v757
        %s763 = scalar_lea.vmem %s6, 48
        %v764 = vld [vmem:[%s763] sm:$0xff]
        %v765 = vld [vmem:[%s763 + $0x8] sm:$0xff]
        %v766 = vmul.f32 %v764, %v762
        %v767 = vmul.f32 %v765, %v761
        %v768 = vadd.f32 %v754, %v766
        %v769 = vadd.f32 %v755, %v767
        %770 = vrot.lane.b32.xlu0 %v704, 47
        %v771 = vpop.permute.xlu0 %770
        %772 = vrot.lane.b32.xlu0 %v706, 47
        %v773 = vpop.permute.xlu0 %772
        %vm774 = vcmp.lt.s32.totalorder %v718, 47
        %v775 = vsel %vm774, %v771, %v773
        %v776 = vsel %vm774, %v773, %v771
        %s777 = scalar_lea.vmem %s6, 64
        %v778 = vld [vmem:[%s777] sm:$0xff]
        %v779 = vld [vmem:[%s777 + $0x8] sm:$0xff]
        %v780 = vmul.f32 %v778, %v776
        %v781 = vmul.f32 %v779, %v775
        %v782 = vadd.f32 %v768, %v780
        %v783 = vadd.f32 %v769, %v781
        %784 = vrot.lane.b32.xlu0 %v704, 46
        %v785 = vpop.permute.xlu0 %784
        %786 = vrot.lane.b32.xlu0 %v706, 46
        %v787 = vpop.permute.xlu0 %786
        %vm788 = vcmp.lt.s32.totalorder %v718, 46
        %v789 = vsel %vm788, %v785, %v787
        %v790 = vsel %vm788, %v787, %v785
        %s791 = scalar_lea.vmem %s6, 80
        %v792 = vld [vmem:[%s791] sm:$0xff]
        %v793 = vld [vmem:[%s791 + $0x8] sm:$0xff]
        %v794 = vmul.f32 %v792, %v790
        %v795 = vmul.f32 %v793, %v789
        %v796 = vadd.f32 %v782, %v794
        %v797 = vadd.f32 %v783, %v795
        %798 = vrot.lane.b32.xlu0 %v704, 45
        %v799 = vpop.permute.xlu0 %798
        %800 = vrot.lane.b32.xlu0 %v706, 45
        %v801 = vpop.permute.xlu0 %800
        %vm802 = vcmp.lt.s32.totalorder %v718, 45
        %v803 = vsel %vm802, %v799, %v801
        %v804 = vsel %vm802, %v801, %v799
        %s805 = scalar_lea.vmem %s6, 96
        %v806 = vld [vmem:[%s805] sm:$0xff]
        %v807 = vld [vmem:[%s805 + $0x8] sm:$0xff]
        %v808 = vmul.f32 %v806, %v804
        %v809 = vmul.f32 %v807, %v803
        %v810 = vadd.f32 %v796, %v808
        %v811 = vadd.f32 %v797, %v809
        %812 = vrot.lane.b32.xlu0 %v704, 35
        %v813 = vpop.permute.xlu0 %812
        %814 = vrot.lane.b32.xlu0 %v706, 35
        %v815 = vpop.permute.xlu0 %814
        %vm816 = vcmp.lt.s32.totalorder %v718, 35
        %v817 = vsel %vm816, %v813, %v815
        %v818 = vsel %vm816, %v815, %v813
        %s819 = scalar_lea.vmem %s6, 112
        %v820 = vld [vmem:[%s819] sm:$0xff]
        %v821 = vld [vmem:[%s819 + $0x8] sm:$0xff]
        %v822 = vmul.f32 %v820, %v818
        %v823 = vmul.f32 %v821, %v817
        %v824 = vadd.f32 %v810, %v822
        %v825 = vadd.f32 %v811, %v823
        %826 = vrot.lane.b32.xlu0 %v704, 34
        %v827 = vpop.permute.xlu0 %826
        %828 = vrot.lane.b32.xlu0 %v706, 34
        %v829 = vpop.permute.xlu0 %828
        %vm830 = vcmp.lt.s32.totalorder %v718, 34
        %v831 = vsel %vm830, %v827, %v829
        %v832 = vsel %vm830, %v829, %v827
        %s833 = scalar_lea.vmem %s6, 128
        %v834 = vld [vmem:[%s833] sm:$0xff]
        %v835 = vld [vmem:[%s833 + $0x8] sm:$0xff]
        %v836 = vmul.f32 %v834, %v832
        %v837 = vmul.f32 %v835, %v831
        %v838 = vadd.f32 %v824, %v836
        %v839 = vadd.f32 %v825, %v837
        %840 = vrot.lane.b32.xlu0 %v704, 33
        %v841 = vpop.permute.xlu0 %840
        %842 = vrot.lane.b32.xlu0 %v706, 33
        %v843 = vpop.permute.xlu0 %842
        %vm844 = vcmp.lt.s32.totalorder %v718, 33
        %v845 = vsel %vm844, %v841, %v843
        %v846 = vsel %vm844, %v843, %v841
        %s847 = scalar_lea.vmem %s6, 144
        %v848 = vld [vmem:[%s847] sm:$0xff]
        %v849 = vld [vmem:[%s847 + $0x8] sm:$0xff]
        %v850 = vmul.f32 %v848, %v846
        %v851 = vmul.f32 %v849, %v845
        %v852 = vadd.f32 %v838, %v850
        %v853 = vadd.f32 %v839, %v851
        %854 = vrot.lane.b32.xlu0 %v704, 32
        %v855 = vpop.permute.xlu0 %854
        %856 = vrot.lane.b32.xlu0 %v706, 32
        %v857 = vpop.permute.xlu0 %856
        %vm858 = vcmp.lt.s32.totalorder %v718, 32
        %v859 = vsel %vm858, %v855, %v857
        %v860 = vsel %vm858, %v857, %v855
        %s861 = scalar_lea.vmem %s6, 160
        %v862 = vld [vmem:[%s861] sm:$0xff]
        %v863 = vld [vmem:[%s861 + $0x8] sm:$0xff]
        %v864 = vmul.f32 %v862, %v860
        %v865 = vmul.f32 %v863, %v859
        %v866 = vadd.f32 %v852, %v864
        %v867 = vadd.f32 %v853, %v865
        %868 = vrot.lane.b32.xlu0 %v704, 31
        %v869 = vpop.permute.xlu0 %868
        %870 = vrot.lane.b32.xlu0 %v706, 31
        %v871 = vpop.permute.xlu0 %870
        %vm872 = vcmp.lt.s32.totalorder %v718, 31
        %v873 = vsel %vm872, %v869, %v871
        %v874 = vsel %vm872, %v871, %v869
        %s875 = scalar_lea.vmem %s6, 176
        %v876 = vld [vmem:[%s875] sm:$0xff]
        %v877 = vld [vmem:[%s875 + $0x8] sm:$0xff]
        %v878 = vmul.f32 %v876, %v874
        %v879 = vmul.f32 %v877, %v873
        %v880 = vadd.f32 %v866, %v878
        %v881 = vadd.f32 %v867, %v879
        %882 = vrot.lane.b32.xlu0 %v704, 30
        %v883 = vpop.permute.xlu0 %882
        %884 = vrot.lane.b32.xlu0 %v706, 30
        %v885 = vpop.permute.xlu0 %884
        %vm886 = vcmp.lt.s32.totalorder %v718, 30
        %v887 = vsel %vm886, %v883, %v885
        %v888 = vsel %vm886, %v885, %v883
        %s889 = scalar_lea.vmem %s6, 192
        %v890 = vld [vmem:[%s889] sm:$0xff]
        %v891 = vld [vmem:[%s889 + $0x8] sm:$0xff]
        %v892 = vmul.f32 %v890, %v888
        %v893 = vmul.f32 %v891, %v887
        %v894 = vadd.f32 %v880, %v892
        %v895 = vadd.f32 %v881, %v893
        %896 = vrot.lane.b32.xlu0 %v704, 29
        %v897 = vpop.permute.xlu0 %896
        %898 = vrot.lane.b32.xlu0 %v706, 29
        %v899 = vpop.permute.xlu0 %898
        %vm900 = vcmp.lt.s32.totalorder %v718, 29
        %v901 = vsel %vm900, %v897, %v899
        %v902 = vsel %vm900, %v899, %v897
        %s903 = scalar_lea.vmem %s6, 208
        %v904 = vld [vmem:[%s903] sm:$0xff]
        %v905 = vld [vmem:[%s903 + $0x8] sm:$0xff]
        %v906 = vmul.f32 %v904, %v902
        %v907 = vmul.f32 %v905, %v901
        %v908 = vadd.f32 %v894, %v906
        %v909 = vadd.f32 %v895, %v907
        %910 = vrot.lane.b32.xlu0 %v704, 19
        %v911 = vpop.permute.xlu0 %910
        %912 = vrot.lane.b32.xlu0 %v706, 19
        %v913 = vpop.permute.xlu0 %912
        %vm914 = vcmp.lt.s32.totalorder %v718, 19
        %v915 = vsel %vm914, %v911, %v913
        %v916 = vsel %vm914, %v913, %v911
        %s917 = scalar_lea.vmem %s6, 224
        %v918 = vld [vmem:[%s917] sm:$0xff]
        %v919 = vld [vmem:[%s917 + $0x8] sm:$0xff]
        %v920 = vmul.f32 %v918, %v916
        %v921 = vmul.f32 %v919, %v915
        %v922 = vadd.f32 %v908, %v920
        %v923 = vadd.f32 %v909, %v921
        %924 = vrot.lane.b32.xlu0 %v704, 18
        %v925 = vpop.permute.xlu0 %924
        %926 = vrot.lane.b32.xlu0 %v706, 18
        %v927 = vpop.permute.xlu0 %926
        %vm928 = vcmp.lt.s32.totalorder %v718, 18
        %v929 = vsel %vm928, %v925, %v927
        %v930 = vsel %vm928, %v927, %v925
        %s931 = scalar_lea.vmem %s6, 240
        %v932 = vld [vmem:[%s931] sm:$0xff]
        %v933 = vld [vmem:[%s931 + $0x8] sm:$0xff]
        %v934 = vmul.f32 %v932, %v930
        %v935 = vmul.f32 %v933, %v929
        %v936 = vadd.f32 %v922, %v934
        %v937 = vadd.f32 %v923, %v935
        %938 = vrot.lane.b32.xlu0 %v704, 17
        %v939 = vpop.permute.xlu0 %938
        %940 = vrot.lane.b32.xlu0 %v706, 17
        %v941 = vpop.permute.xlu0 %940
        %vm942 = vcmp.lt.s32.totalorder %v718, 17
        %v943 = vsel %vm942, %v939, %v941
        %v944 = vsel %vm942, %v941, %v939
        %s945 = scalar_lea.vmem %s6, 256
        %v946 = vld [vmem:[%s945] sm:$0xff]
        %v947 = vld [vmem:[%s945 + $0x8] sm:$0xff]
        %v948 = vmul.f32 %v946, %v944
        %v949 = vmul.f32 %v947, %v943
        %v950 = vadd.f32 %v936, %v948
        %v951 = vadd.f32 %v937, %v949
        %952 = vrot.lane.b32.xlu0 %v704, 16
        %v953 = vpop.permute.xlu0 %952
        %954 = vrot.lane.b32.xlu0 %v706, 16
        %v955 = vpop.permute.xlu0 %954
        %vm956 = vcmp.lt.s32.totalorder %v718, 16
        %v957 = vsel %vm956, %v953, %v955
        %v958 = vsel %vm956, %v955, %v953
        %s959 = scalar_lea.vmem %s6, 272
        %v960 = vld [vmem:[%s959] sm:$0xff]
        %v961 = vld [vmem:[%s959 + $0x8] sm:$0xff]
        %v962 = vmul.f32 %v960, %v958
        %v963 = vmul.f32 %v961, %v957
        %v964 = vadd.f32 %v950, %v962
        %v965 = vadd.f32 %v951, %v963
        %966 = vrot.lane.b32.xlu0 %v704, 15
        %v967 = vpop.permute.xlu0 %966
        %968 = vrot.lane.b32.xlu0 %v706, 15
        %v969 = vpop.permute.xlu0 %968
        %vm970 = vcmp.lt.s32.totalorder %v718, 15
        %v971 = vsel %vm970, %v967, %v969
        %v972 = vsel %vm970, %v969, %v967
        %s973 = scalar_lea.vmem %s6, 288
        %v974 = vld [vmem:[%s973] sm:$0xff]
        %v975 = vld [vmem:[%s973 + $0x8] sm:$0xff]
        %v976 = vmul.f32 %v974, %v972
        %v977 = vmul.f32 %v975, %v971
        %v978 = vadd.f32 %v964, %v976
        %v979 = vadd.f32 %v965, %v977
        %980 = vrot.lane.b32.xlu0 %v704, 14
        %v981 = vpop.permute.xlu0 %980
        %982 = vrot.lane.b32.xlu0 %v706, 14
        %v983 = vpop.permute.xlu0 %982
        %vm984 = vcmp.lt.s32.totalorder %v718, 14
        %v985 = vsel %vm984, %v981, %v983
        %v986 = vsel %vm984, %v983, %v981
        %s987 = scalar_lea.vmem %s6, 304
        %v988 = vld [vmem:[%s987] sm:$0xff]
        %v989 = vld [vmem:[%s987 + $0x8] sm:$0xff]
        %v990 = vmul.f32 %v988, %v986
        %v991 = vmul.f32 %v989, %v985
        %v992 = vadd.f32 %v978, %v990
        %v993 = vadd.f32 %v979, %v991
        %994 = vrot.lane.b32.xlu0 %v704, 13
        %v995 = vpop.permute.xlu0 %994
        %996 = vrot.lane.b32.xlu0 %v706, 13
        %v997 = vpop.permute.xlu0 %996
        %vm998 = vcmp.lt.s32.totalorder %v718, 13
        %v999 = vsel %vm998, %v995, %v997
        %v1000 = vsel %vm998, %v997, %v995
        %s1001 = scalar_lea.vmem %s6, 320
        %v1002 = vld [vmem:[%s1001] sm:$0xff]
        %v1003 = vld [vmem:[%s1001 + $0x8] sm:$0xff]
        %v1004 = vmul.f32 %v1002, %v1000
        %v1005 = vmul.f32 %v1003, %v999
        %v1006 = vadd.f32 %v992, %v1004
        %v1007 = vadd.f32 %v993, %v1005
        %1008 = vrot.lane.b32.xlu0 %v704, 3
        %v1009 = vpop.permute.xlu0 %1008
        %1010 = vrot.lane.b32.xlu0 %v706, 3
        %v1011 = vpop.permute.xlu0 %1010
        %vm1012 = vcmp.lt.s32.totalorder %v718, 3
        %v1013 = vsel %vm1012, %v1009, %v1011
        %v1014 = vsel %vm1012, %v1011, %v1009
        %s1015 = scalar_lea.vmem %s6, 336
        %v1016 = vld [vmem:[%s1015] sm:$0xff]
        %v1017 = vld [vmem:[%s1015 + $0x8] sm:$0xff]
        %v1018 = vmul.f32 %v1016, %v1014
        %v1019 = vmul.f32 %v1017, %v1013
        %v1020 = vadd.f32 %v1006, %v1018
        %v1021 = vadd.f32 %v1007, %v1019
        %1022 = vrot.lane.b32.xlu0 %v704, 2
        %v1023 = vpop.permute.xlu0 %1022
        %1024 = vrot.lane.b32.xlu0 %v706, 2
        %v1025 = vpop.permute.xlu0 %1024
        %vm1026 = vcmp.lt.s32.totalorder %v718, 2
        %v1027 = vsel %vm1026, %v1023, %v1025
        %v1028 = vsel %vm1026, %v1025, %v1023
        %s1029 = scalar_lea.vmem %s6, 352
        %v1030 = vld [vmem:[%s1029] sm:$0xff]
        %v1031 = vld [vmem:[%s1029 + $0x8] sm:$0xff]
        %v1032 = vmul.f32 %v1030, %v1028
        %v1033 = vmul.f32 %v1031, %v1027
        %v1034 = vadd.f32 %v1020, %v1032
        %v1035 = vadd.f32 %v1021, %v1033
        %1036 = vrot.lane.b32.xlu0 %v704, 1
        %v1037 = vpop.permute.xlu0 %1036
        %1038 = vrot.lane.b32.xlu0 %v706, 1
        %v1039 = vpop.permute.xlu0 %1038
        %vm1040 = vcmp.lt.s32.totalorder %v718, 1
        %v1041 = vsel %vm1040, %v1037, %v1039
        %v1042 = vsel %vm1040, %v1039, %v1037
        %s1043 = scalar_lea.vmem %s6, 368
        %v1044 = vld [vmem:[%s1043] sm:$0xff]
        %v1045 = vld [vmem:[%s1043 + $0x8] sm:$0xff]
        %v1046 = vmul.f32 %v1044, %v1042
        %v1047 = vmul.f32 %v1045, %v1041
        %v1048 = vadd.f32 %v1034, %v1046
        %v1049 = vadd.f32 %v1035, %v1047
        %1050 = vrot.lane.b32.xlu0 %v704, 127
        %v1051 = vpop.permute.xlu0 %1050
        %1052 = vrot.lane.b32.xlu0 %v706, 127
        %v1053 = vpop.permute.xlu0 %1052
        %vm1054 = vcmp.lt.s32.totalorder %v718, 127
        %v1055 = vsel %vm1054, %v1051, %v1053
        %v1056 = vsel %vm1054, %v1053, %v1051
        %s1057 = scalar_lea.vmem %s6, 400
        %v1058 = vld [vmem:[%s1057] sm:$0xff]
        %v1059 = vld [vmem:[%s1057 + $0x8] sm:$0xff]
        %v1060 = vmul.f32 %v1058, %v1055
        %v1061 = vmul.f32 %v1059, %v1056
        %v1062 = vadd.f32 %v1048, %v1060
        %v1063 = vadd.f32 %v1049, %v1061
        %1064 = vrot.lane.b32.xlu0 %v704, 126
        %v1065 = vpop.permute.xlu0 %1064
        %1066 = vrot.lane.b32.xlu0 %v706, 126
        %v1067 = vpop.permute.xlu0 %1066
        %vm1068 = vcmp.lt.s32.totalorder %v718, 126
        %v1069 = vsel %vm1068, %v1065, %v1067
        %v1070 = vsel %vm1068, %v1067, %v1065
        %s1071 = scalar_lea.vmem %s6, 416
        %v1072 = vld [vmem:[%s1071] sm:$0xff]
        %v1073 = vld [vmem:[%s1071 + $0x8] sm:$0xff]
        %v1074 = vmul.f32 %v1072, %v1069
        %v1075 = vmul.f32 %v1073, %v1070
        %v1076 = vadd.f32 %v1062, %v1074
        %v1077 = vadd.f32 %v1063, %v1075
        %1078 = vrot.lane.b32.xlu0 %v704, 125
        %v1079 = vpop.permute.xlu0 %1078
        %1080 = vrot.lane.b32.xlu0 %v706, 125
        %v1081 = vpop.permute.xlu0 %1080
        %vm1082 = vcmp.lt.s32.totalorder %v718, 125
        %v1083 = vsel %vm1082, %v1079, %v1081
        %v1084 = vsel %vm1082, %v1081, %v1079
        %s1085 = scalar_lea.vmem %s6, 432
        %v1086 = vld [vmem:[%s1085] sm:$0xff]
        %v1087 = vld [vmem:[%s1085 + $0x8] sm:$0xff]
        %v1088 = vmul.f32 %v1086, %v1083
        %v1089 = vmul.f32 %v1087, %v1084
        %v1090 = vadd.f32 %v1076, %v1088
        %v1091 = vadd.f32 %v1077, %v1089
        %1092 = vrot.lane.b32.xlu0 %v704, 115
        %v1093 = vpop.permute.xlu0 %1092
        %1094 = vrot.lane.b32.xlu0 %v706, 115
        %v1095 = vpop.permute.xlu0 %1094
        %vm1096 = vcmp.lt.s32.totalorder %v718, 115
        %v1097 = vsel %vm1096, %v1093, %v1095
        %v1098 = vsel %vm1096, %v1095, %v1093
        %s1099 = scalar_lea.vmem %s6, 448
        %v1100 = vld [vmem:[%s1099] sm:$0xff]
        %v1101 = vld [vmem:[%s1099 + $0x8] sm:$0xff]
        %v1102 = vmul.f32 %v1100, %v1097
        %v1103 = vmul.f32 %v1101, %v1098
        %v1104 = vadd.f32 %v1090, %v1102
        %v1105 = vadd.f32 %v1091, %v1103
        %1106 = vrot.lane.b32.xlu0 %v704, 114
        %v1107 = vpop.permute.xlu0 %1106
        %1108 = vrot.lane.b32.xlu0 %v706, 114
        %v1109 = vpop.permute.xlu0 %1108
        %vm1110 = vcmp.lt.s32.totalorder %v718, 114
        %v1111 = vsel %vm1110, %v1107, %v1109
        %v1112 = vsel %vm1110, %v1109, %v1107
        %s1113 = scalar_lea.vmem %s6, 464
        %v1114 = vld [vmem:[%s1113] sm:$0xff]
        %v1115 = vld [vmem:[%s1113 + $0x8] sm:$0xff]
        %v1116 = vmul.f32 %v1114, %v1111
        %v1117 = vmul.f32 %v1115, %v1112
        %v1118 = vadd.f32 %v1104, %v1116
        %v1119 = vadd.f32 %v1105, %v1117
        %1120 = vrot.lane.b32.xlu0 %v704, 113
        %v1121 = vpop.permute.xlu0 %1120
        %1122 = vrot.lane.b32.xlu0 %v706, 113
        %v1123 = vpop.permute.xlu0 %1122
        %vm1124 = vcmp.lt.s32.totalorder %v718, 113
        %v1125 = vsel %vm1124, %v1121, %v1123
        %v1126 = vsel %vm1124, %v1123, %v1121
        %s1127 = scalar_lea.vmem %s6, 480
        %v1128 = vld [vmem:[%s1127] sm:$0xff]
        %v1129 = vld [vmem:[%s1127 + $0x8] sm:$0xff]
        %v1130 = vmul.f32 %v1128, %v1125
        %v1131 = vmul.f32 %v1129, %v1126
        %v1132 = vadd.f32 %v1118, %v1130
        %v1133 = vadd.f32 %v1119, %v1131
        %1134 = vrot.lane.b32.xlu0 %v704, 112
        %v1135 = vpop.permute.xlu0 %1134
        %1136 = vrot.lane.b32.xlu0 %v706, 112
        %v1137 = vpop.permute.xlu0 %1136
        %vm1138 = vcmp.lt.s32.totalorder %v718, 112
        %v1139 = vsel %vm1138, %v1135, %v1137
        %v1140 = vsel %vm1138, %v1137, %v1135
        %s1141 = scalar_lea.vmem %s6, 496
        %v1142 = vld [vmem:[%s1141] sm:$0xff]
        %v1143 = vld [vmem:[%s1141 + $0x8] sm:$0xff]
        %v1144 = vmul.f32 %v1142, %v1139
        %v1145 = vmul.f32 %v1143, %v1140
        %v1146 = vadd.f32 %v1132, %v1144
        %v1147 = vadd.f32 %v1133, %v1145
        %1148 = vrot.lane.b32.xlu0 %v704, 111
        %v1149 = vpop.permute.xlu0 %1148
        %1150 = vrot.lane.b32.xlu0 %v706, 111
        %v1151 = vpop.permute.xlu0 %1150
        %vm1152 = vcmp.lt.s32.totalorder %v718, 111
        %v1153 = vsel %vm1152, %v1149, %v1151
        %v1154 = vsel %vm1152, %v1151, %v1149
        %s1155 = scalar_lea.vmem %s6, 512
        %v1156 = vld [vmem:[%s1155] sm:$0xff]
        %v1157 = vld [vmem:[%s1155 + $0x8] sm:$0xff]
        %v1158 = vmul.f32 %v1156, %v1153
        %v1159 = vmul.f32 %v1157, %v1154
        %v1160 = vadd.f32 %v1146, %v1158
        %v1161 = vadd.f32 %v1147, %v1159
        %1162 = vrot.lane.b32.xlu0 %v704, 110
        %v1163 = vpop.permute.xlu0 %1162
        %1164 = vrot.lane.b32.xlu0 %v706, 110
        %v1165 = vpop.permute.xlu0 %1164
        %vm1166 = vcmp.lt.s32.totalorder %v718, 110
        %v1167 = vsel %vm1166, %v1163, %v1165
        %v1168 = vsel %vm1166, %v1165, %v1163
        %s1169 = scalar_lea.vmem %s6, 528
        %v1170 = vld [vmem:[%s1169] sm:$0xff]
        %v1171 = vld [vmem:[%s1169 + $0x8] sm:$0xff]
        %v1172 = vmul.f32 %v1170, %v1167
        %v1173 = vmul.f32 %v1171, %v1168
        %v1174 = vadd.f32 %v1160, %v1172
        %v1175 = vadd.f32 %v1161, %v1173
        %1176 = vrot.lane.b32.xlu0 %v704, 109
        %v1177 = vpop.permute.xlu0 %1176
        %1178 = vrot.lane.b32.xlu0 %v706, 109
        %v1179 = vpop.permute.xlu0 %1178
        %vm1180 = vcmp.lt.s32.totalorder %v718, 109
        %v1181 = vsel %vm1180, %v1177, %v1179
        %v1182 = vsel %vm1180, %v1179, %v1177
        %s1183 = scalar_lea.vmem %s6, 544
        %v1184 = vld [vmem:[%s1183] sm:$0xff]
        %v1185 = vld [vmem:[%s1183 + $0x8] sm:$0xff]
        %v1186 = vmul.f32 %v1184, %v1181
        %v1187 = vmul.f32 %v1185, %v1182
        %v1188 = vadd.f32 %v1174, %v1186
        %v1189 = vadd.f32 %v1175, %v1187
        %1190 = vrot.lane.b32.xlu0 %v704, 99
        %v1191 = vpop.permute.xlu0 %1190
        %1192 = vrot.lane.b32.xlu0 %v706, 99
        %v1193 = vpop.permute.xlu0 %1192
        %vm1194 = vcmp.lt.s32.totalorder %v718, 99
        %v1195 = vsel %vm1194, %v1191, %v1193
        %v1196 = vsel %vm1194, %v1193, %v1191
        %s1197 = scalar_lea.vmem %s6, 560
        %v1198 = vld [vmem:[%s1197] sm:$0xff]
        %v1199 = vld [vmem:[%s1197 + $0x8] sm:$0xff]
        %v1200 = vmul.f32 %v1198, %v1195
        %v1201 = vmul.f32 %v1199, %v1196
        %v1202 = vadd.f32 %v1188, %v1200
        %v1203 = vadd.f32 %v1189, %v1201
        %1204 = vrot.lane.b32.xlu0 %v704, 98
        %v1205 = vpop.permute.xlu0 %1204
        %1206 = vrot.lane.b32.xlu0 %v706, 98
        %v1207 = vpop.permute.xlu0 %1206
        %vm1208 = vcmp.lt.s32.totalorder %v718, 98
        %v1209 = vsel %vm1208, %v1205, %v1207
        %v1210 = vsel %vm1208, %v1207, %v1205
        %s1211 = scalar_lea.vmem %s6, 576
        %v1212 = vld [vmem:[%s1211] sm:$0xff]
        %v1213 = vld [vmem:[%s1211 + $0x8] sm:$0xff]
        %v1214 = vmul.f32 %v1212, %v1209
        %v1215 = vmul.f32 %v1213, %v1210
        %v1216 = vadd.f32 %v1202, %v1214
        %v1217 = vadd.f32 %v1203, %v1215
        %1218 = vrot.lane.b32.xlu0 %v704, 97
        %v1219 = vpop.permute.xlu0 %1218
        %1220 = vrot.lane.b32.xlu0 %v706, 97
        %v1221 = vpop.permute.xlu0 %1220
        %vm1222 = vcmp.lt.s32.totalorder %v718, 97
        %v1223 = vsel %vm1222, %v1219, %v1221
        %v1224 = vsel %vm1222, %v1221, %v1219
        %s1225 = scalar_lea.vmem %s6, 592
        %v1226 = vld [vmem:[%s1225] sm:$0xff]
        %v1227 = vld [vmem:[%s1225 + $0x8] sm:$0xff]
        %v1228 = vmul.f32 %v1226, %v1223
        %v1229 = vmul.f32 %v1227, %v1224
        %v1230 = vadd.f32 %v1216, %v1228
        %v1231 = vadd.f32 %v1217, %v1229
        %1232 = vrot.lane.b32.xlu0 %v704, 96
        %v1233 = vpop.permute.xlu0 %1232
        %1234 = vrot.lane.b32.xlu0 %v706, 96
        %v1235 = vpop.permute.xlu0 %1234
        %vm1236 = vcmp.lt.s32.totalorder %v718, 96
        %v1237 = vsel %vm1236, %v1233, %v1235
        %v1238 = vsel %vm1236, %v1235, %v1233
        %s1239 = scalar_lea.vmem %s6, 608
        %v1240 = vld [vmem:[%s1239] sm:$0xff]
        %v1241 = vld [vmem:[%s1239 + $0x8] sm:$0xff]
        %v1242 = vmul.f32 %v1240, %v1237
        %v1243 = vmul.f32 %v1241, %v1238
        %v1244 = vadd.f32 %v1230, %v1242
        %v1245 = vadd.f32 %v1231, %v1243
        %1246 = vrot.lane.b32.xlu0 %v704, 95
        %v1247 = vpop.permute.xlu0 %1246
        %1248 = vrot.lane.b32.xlu0 %v706, 95
        %v1249 = vpop.permute.xlu0 %1248
        %vm1250 = vcmp.lt.s32.totalorder %v718, 95
        %v1251 = vsel %vm1250, %v1247, %v1249
        %v1252 = vsel %vm1250, %v1249, %v1247
        %s1253 = scalar_lea.vmem %s6, 624
        %v1254 = vld [vmem:[%s1253] sm:$0xff]
        %v1255 = vld [vmem:[%s1253 + $0x8] sm:$0xff]
        %v1256 = vmul.f32 %v1254, %v1251
        %v1257 = vmul.f32 %v1255, %v1252
        %v1258 = vadd.f32 %v1244, %v1256
        %v1259 = vadd.f32 %v1245, %v1257
        %1260 = vrot.lane.b32.xlu0 %v704, 94
        %v1261 = vpop.permute.xlu0 %1260
        %1262 = vrot.lane.b32.xlu0 %v706, 94
        %v1263 = vpop.permute.xlu0 %1262
        %vm1264 = vcmp.lt.s32.totalorder %v718, 94
        %v1265 = vsel %vm1264, %v1261, %v1263
        %v1266 = vsel %vm1264, %v1263, %v1261
        %s1267 = scalar_lea.vmem %s6, 640
        %v1268 = vld [vmem:[%s1267] sm:$0xff]
        %v1269 = vld [vmem:[%s1267 + $0x8] sm:$0xff]
        %v1270 = vmul.f32 %v1268, %v1265
        %v1271 = vmul.f32 %v1269, %v1266
        %v1272 = vadd.f32 %v1258, %v1270
        %v1273 = vadd.f32 %v1259, %v1271
        %1274 = vrot.lane.b32.xlu0 %v704, 93
        %v1275 = vpop.permute.xlu0 %1274
        %1276 = vrot.lane.b32.xlu0 %v706, 93
        %v1277 = vpop.permute.xlu0 %1276
        %vm1278 = vcmp.lt.s32.totalorder %v718, 93
        %v1279 = vsel %vm1278, %v1275, %v1277
        %v1280 = vsel %vm1278, %v1277, %v1275
        %s1281 = scalar_lea.vmem %s6, 656
        %v1282 = vld [vmem:[%s1281] sm:$0xff]
        %v1283 = vld [vmem:[%s1281 + $0x8] sm:$0xff]
        %v1284 = vmul.f32 %v1282, %v1279
        %v1285 = vmul.f32 %v1283, %v1280
        %v1286 = vadd.f32 %v1272, %v1284
        %v1287 = vadd.f32 %v1273, %v1285
        %1288 = vrot.lane.b32.xlu0 %v704, 83
        %v1289 = vpop.permute.xlu0 %1288
        %1290 = vrot.lane.b32.xlu0 %v706, 83
        %v1291 = vpop.permute.xlu0 %1290
        %vm1292 = vcmp.lt.s32.totalorder %v718, 83
        %v1293 = vsel %vm1292, %v1289, %v1291
        %v1294 = vsel %vm1292, %v1291, %v1289
        %s1295 = scalar_lea.vmem %s6, 672
        %v1296 = vld [vmem:[%s1295] sm:$0xff]
        %v1297 = vld [vmem:[%s1295 + $0x8] sm:$0xff]
        %v1298 = vmul.f32 %v1296, %v1293
        %v1299 = vmul.f32 %v1297, %v1294
        %v1300 = vadd.f32 %v1286, %v1298
        %v1301 = vadd.f32 %v1287, %v1299
        %1302 = vrot.lane.b32.xlu0 %v704, 82
        %v1303 = vpop.permute.xlu0 %1302
        %1304 = vrot.lane.b32.xlu0 %v706, 82
        %v1305 = vpop.permute.xlu0 %1304
        %vm1306 = vcmp.lt.s32.totalorder %v718, 82
        %v1307 = vsel %vm1306, %v1303, %v1305
        %v1308 = vsel %vm1306, %v1305, %v1303
        %s1309 = scalar_lea.vmem %s6, 688
        %v1310 = vld [vmem:[%s1309] sm:$0xff]
        %v1311 = vld [vmem:[%s1309 + $0x8] sm:$0xff]
        %v1312 = vmul.f32 %v1310, %v1307
        %v1313 = vmul.f32 %v1311, %v1308
        %v1314 = vadd.f32 %v1300, %v1312
        %v1315 = vadd.f32 %v1301, %v1313
        %1316 = vrot.lane.b32.xlu0 %v704, 81
        %v1317 = vpop.permute.xlu0 %1316
        %1318 = vrot.lane.b32.xlu0 %v706, 81
        %v1319 = vpop.permute.xlu0 %1318
        %vm1320 = vcmp.lt.s32.totalorder %v718, 81
        %v1321 = vsel %vm1320, %v1317, %v1319
        %v1322 = vsel %vm1320, %v1319, %v1317
        %s1323 = scalar_lea.vmem %s6, 704
        %v1324 = vld [vmem:[%s1323] sm:$0xff]
        %v1325 = vld [vmem:[%s1323 + $0x8] sm:$0xff]
        %v1326 = vmul.f32 %v1324, %v1321
        %v1327 = vmul.f32 %v1325, %v1322
        %v1328 = vadd.f32 %v1314, %v1326
        %v1329 = vadd.f32 %v1315, %v1327
        %1330 = vrot.lane.b32.xlu0 %v704, 80
        %v1331 = vpop.permute.xlu0 %1330
        %1332 = vrot.lane.b32.xlu0 %v706, 80
        %v1333 = vpop.permute.xlu0 %1332
        %vm1334 = vcmp.lt.s32.totalorder %v718, 80
        %v1335 = vsel %vm1334, %v1331, %v1333
        %v1336 = vsel %vm1334, %v1333, %v1331
        %s1337 = scalar_lea.vmem %s6, 720
        %v1338 = vld [vmem:[%s1337] sm:$0xff]
        %v1339 = vld [vmem:[%s1337 + $0x8] sm:$0xff]
        %v1340 = vmul.f32 %v1338, %v1335
        %v1341 = vmul.f32 %v1339, %v1336
        %v1342 = vadd.f32 %v1328, %v1340
        %v1343 = vadd.f32 %v1329, %v1341
        %1344 = vrot.lane.b32.xlu0 %v704, 79
        %v1345 = vpop.permute.xlu0 %1344
        %1346 = vrot.lane.b32.xlu0 %v706, 79
        %v1347 = vpop.permute.xlu0 %1346
        %vm1348 = vcmp.lt.s32.totalorder %v718, 79
        %v1349 = vsel %vm1348, %v1345, %v1347
        %v1350 = vsel %vm1348, %v1347, %v1345
        %s1351 = scalar_lea.vmem %s6, 736
        %v1352 = vld [vmem:[%s1351] sm:$0xff]
        %v1353 = vld [vmem:[%s1351 + $0x8] sm:$0xff]
        %v1354 = vmul.f32 %v1352, %v1349
        %v1355 = vmul.f32 %v1353, %v1350
        %v1356 = vadd.f32 %v1342, %v1354
        %v1357 = vadd.f32 %v1343, %v1355
        %1358 = vrot.lane.b32.xlu0 %v704, 78
        %v1359 = vpop.permute.xlu0 %1358
        %1360 = vrot.lane.b32.xlu0 %v706, 78
        %v1361 = vpop.permute.xlu0 %1360
        %vm1362 = vcmp.lt.s32.totalorder %v718, 78
        %v1363 = vsel %vm1362, %v1359, %v1361
        %v1364 = vsel %vm1362, %v1361, %v1359
        %s1365 = scalar_lea.vmem %s6, 752
        %v1366 = vld [vmem:[%s1365] sm:$0xff]
        %v1367 = vld [vmem:[%s1365 + $0x8] sm:$0xff]
        %v1368 = vmul.f32 %v1366, %v1363
        %v1369 = vmul.f32 %v1367, %v1364
        %v1370 = vadd.f32 %v1356, %v1368
        %v1371 = vadd.f32 %v1357, %v1369
        %1372 = vrot.lane.b32.xlu0 %v704, 77
        %v1373 = vpop.permute.xlu0 %1372
        %1374 = vrot.lane.b32.xlu0 %v706, 77
        %v1375 = vpop.permute.xlu0 %1374
        %vm1376 = vcmp.lt.s32.totalorder %v718, 77
        %v1377 = vsel %vm1376, %v1373, %v1375
        %v1378 = vsel %vm1376, %v1375, %v1373
        %s1379 = scalar_lea.vmem %s6, 768
        %v1380 = vld [vmem:[%s1379] sm:$0xff]
        %v1381 = vld [vmem:[%s1379 + $0x8] sm:$0xff]
        %v1382 = vmul.f32 %v1380, %v1377
        %v1383 = vmul.f32 %v1381, %v1378
        %v1384 = vadd.f32 %v1370, %v1382
        %v1385 = vadd.f32 %v1371, %v1383
        %v1386 = vld [vmem:[%s5] sm:$0xff]
        %v1388 = vsel %vm492, %v1386, 0
        %1390 = vmatprep.subr.mxu0 %v1385
        %1391 = vmatpush1.msra.mxu0 %v1384
        %1392 = vmatprep.subr.mxu0 0.0
        %1393 = vmatpush1.msra.mxu0 0.0
        %1394 = vmatprep.subr.mxu0 0.0
        %1395 = vmatpush1.msra.mxu0 0.0
        %1396 = vmatprep.subr.mxu0 0.0
        %1397 = vmatpush1.msra.mxu0 0.0
        %1398 = vmatprep.subr.mxu0 0.0
        %1399 = vmatpush1.msra.mxu0 0.0
        %1400 = vmatprep.subr.mxu0 0.0
        %1401 = vmatpush1.msra.mxu0 0.0
        %1402 = vmatprep.subr.mxu0 0.0
        %1403 = vmatpush1.msra.mxu0 0.0
        %1404 = vmatprep.subr.mxu0 0.0
        %1405 = vmatpush1.msra.mxu0 0.0
        %1406 = vmatprep.subr.mxu0 0.0
        %1407 = vmatpush1.msra.mxu0 0.0
        %1408 = vmatprep.subr.mxu0 0.0
        %1409 = vmatpush1.msra.mxu0 0.0
        %1410 = vmatprep.subr.mxu0 0.0
        %1411 = vmatpush1.msra.mxu0 0.0
        %1412 = vmatprep.subr.mxu0 0.0
        %1413 = vmatpush1.msra.mxu0 0.0
        %1414 = vmatprep.subr.mxu0 0.0
        %1415 = vmatpush1.msra.mxu0 0.0
        %1416 = vmatprep.subr.mxu0 0.0
        %1417 = vmatpush1.msra.mxu0 0.0
        %1418 = vmatprep.subr.mxu0 0.0
        %1419 = vmatpush1.msra.mxu0 0.0
        %1420 = vmatprep.subr.mxu0 0.0
        %1421 = vmatpush1.msra.mxu0 0.0
        %1422 = vmatprep.subr.mxu0 0.0
        %1423 = vmatpush1.msra.mxu0 0.0
        %1424 = vmatprep.subr.mxu0 0.0
        %1425 = vmatpush1.msra.mxu0 0.0
        %1426 = vmatprep.subr.mxu0 0.0
        %1427 = vmatpush1.msra.mxu0 0.0
        %1428 = vmatprep.subr.mxu0 0.0
        %1429 = vmatpush1.msra.mxu0 0.0
        %1430 = vmatprep.subr.mxu0 0.0
        %1431 = vmatpush1.msra.mxu0 0.0
        %1432 = vmatprep.subr.mxu0 0.0
        %1433 = vmatpush1.msra.mxu0 0.0
        %1434 = vmatprep.subr.mxu0 0.0
        %1435 = vmatpush1.msra.mxu0 0.0
        %1436 = vmatprep.subr.mxu0 0.0
        %1437 = vmatpush1.msra.mxu0 0.0
        %1438 = vmatprep.subr.mxu0 0.0
        %1439 = vmatpush1.msra.mxu0 0.0
        %1440 = vmatprep.subr.mxu0 0.0
        %1441 = vmatpush1.msra.mxu0 0.0
        %1442 = vmatprep.subr.mxu0 0.0
        %1443 = vmatpush1.msra.mxu0 0.0
        %1444 = vmatprep.subr.mxu0 0.0
        %1445 = vmatpush1.msra.mxu0 0.0
        %1446 = vmatprep.subr.mxu0 0.0
        %1447 = vmatpush1.msra.mxu0 0.0
        %1448 = vmatprep.subr.mxu0 0.0
        %1449 = vmatpush1.msra.mxu0 0.0
        %1450 = vmatprep.subr.mxu0 0.0
        %1451 = vmatpush1.msra.mxu0 0.0
        %1452 = vmatprep.subr.mxu0 0.0
        %1453 = vmatpush1.msra.mxu0 0.0
        %1454 = vmatprep.mubr.f32.mxu0 0.0
        %1455 = vmatmul.mubr.f32.gmra.mrb[0].mxu0 %v1388
        %v1456 = vpop.f32.mrb[0].mxu0
        %v1457 = vadd.f32 0.0, %v1456
        %v1458 = vpop.f32.mrb[0].mxu0
        %v1459 = vadd.f32 0.0, %v1458
        %1460 = vdwg.mxu0
        %v1461 = vadd.f32 %v704, %v1457
        %v1462 = vadd.f32 %v706, %v1459
        %1463 = vset.pattern.permute.xlu0 1
        %1464 = vperm.xlu0 %1463, %v630
        %v1465 = vpop.permute.xlu0 %1464
        %v1467 = vadd.f32 %v1461, %v1465
        %v1468 = vadd.f32 %v1462, %v1465
        %v1469 = vmul.f32 %v1467, 0.5
        %v1470 = vmul.f32 %v1468, 0.5
        %v1471 = vmul.f32 %v1467, 0.70710677
        %v1472 = vmul.f32 %v1468, 0.70710677
        %vm1473 = vcmp.ge.f32.partialorder %v1471, 0.0
        %vm1474 = vcmp.ge.f32.partialorder %v1472, 0.0
        %v1475 = vsel %vm1473, 1.0, -1.0
        %v1476 = vsel %vm1474, 1.0, -1.0
        %v1477 = vand.u32 2147483647, %v1471
        %v1478 = vand.u32 2147483647, %v1472
        %v1479 = vmul.f32 %v1477, 0.3275911
        %v1480 = vmul.f32 %v1478, 0.3275911
        %v1481 = vadd.f32 %v1479, 1.0
        %v1482 = vadd.f32 %v1480, 1.0
        %v1483 = vrcp.pop %v1481
        %v1484 = vmul.f32 1.0, %v1483
        %v1485 = vrcp.pop %v1482
        %v1486 = vmul.f32 1.0, %v1485
        %v1487 = vmul.f32 %v1484, 1.0614054
        %v1488 = vmul.f32 %v1486, 1.0614054
        %v1489 = vadd.f32 %v1487, -1.4531521
        %v1490 = vadd.f32 %v1488, -1.4531521
        %v1491 = vmul.f32 %v1489, %v1484
        %v1492 = vmul.f32 %v1490, %v1486
        %v1493 = vadd.f32 %v1491, 1.4214138
        %v1494 = vadd.f32 %v1492, 1.4214138
        %v1495 = vmul.f32 %v1493, %v1484
        %v1496 = vmul.f32 %v1494, %v1486
        %v1497 = vadd.f32 %v1495, -0.28449672
        %v1498 = vadd.f32 %v1496, -0.28449672
        %v1499 = vmul.f32 %v1497, %v1484
        %v1500 = vmul.f32 %v1498, %v1486
        %v1501 = vadd.f32 %v1499, 0.2548296
        %v1502 = vadd.f32 %v1500, 0.2548296
        %v1503 = vmul.f32 %v1501, %v1484
        %v1504 = vmul.f32 %v1502, %v1486
        %v1505 = vsub.f32 0.0, %v1477
        %v1506 = vsub.f32 0.0, %v1478
        %v1507 = vmul.f32 %v1505, %v1477
        %v1508 = vmul.f32 %v1506, %v1478
        %v1509 = vmul.f32 %v1507, 1.442695
        %v1510 = vpow.pop %v1509
        %v1511 = vmul.f32 %v1508, 1.442695
        %v1512 = vpow.pop %v1511
        %v1513 = vmul.f32 %v1503, %v1510
        %v1514 = vmul.f32 %v1504, %v1512
        %v1515 = vsub.f32 1.0, %v1513
        %v1516 = vsub.f32 1.0, %v1514
        %v1517 = vmul.f32 %v1475, %v1515
        %v1518 = vmul.f32 %v1476, %v1516
        %v1519 = vadd.f32 %v1517, 1.0
        %v1520 = vadd.f32 %v1518, 1.0
        %v1521 = vmul.f32 %v1469, %v1519
        %v1522 = vmul.f32 %v1470, %v1520
        %1523 = vxpose.xlu0.b32.start [1/16] %v1521, 128
        %1524 = vxpose.xlu0.b32.cont [2/16] 0.0, 128
        %1525 = vxpose.xlu0.b32.cont [3/16] 0.0, 128
        %1526 = vxpose.xlu0.b32.cont [4/16] 0.0, 128
        %1527 = vxpose.xlu0.b32.cont [5/16] 0.0, 128
        %1528 = vxpose.xlu0.b32.cont [6/16] 0.0, 128
        %1529 = vxpose.xlu0.b32.cont [7/16] 0.0, 128
        %1530 = vxpose.xlu0.b32.cont [8/16] 0.0, 128
        %1531 = vxpose.xlu0.b32.cont [9/16] 0.0, 128
        %1532 = vxpose.xlu0.b32.cont [10/16] 0.0, 128
        %1533 = vxpose.xlu0.b32.cont [11/16] 0.0, 128
        %1534 = vxpose.xlu0.b32.cont [12/16] 0.0, 128
        %1535 = vxpose.xlu0.b32.cont [13/16] 0.0, 128
        %1536 = vxpose.xlu0.b32.cont [14/16] 0.0, 128
        %1537 = vxpose.xlu0.b32.cont [15/16] 0.0, 128
        %1538 = vxpose.xlu0.b32.end [16/16] 0.0, 128
        %v1539 = vpop.trf.xlu0
        %v1540 = vpop.trf.xlu0
        %v1541 = vpop.trf.xlu0
        %v1542 = vpop.trf.xlu0
        %v1543 = vpop.trf.xlu0
        %v1544 = vpop.trf.xlu0
        %v1545 = vpop.trf.xlu0
        %v1546 = vpop.trf.xlu0
        %v1547 = vpop.trf.xlu0
        %v1548 = vpop.trf.xlu0
        %v1549 = vpop.trf.xlu0
        %v1550 = vpop.trf.xlu0
        %v1551 = vpop.trf.xlu0
        %v1552 = vpop.trf.xlu0
        %v1553 = vpop.trf.xlu0
        %v1554 = vpop.trf.xlu0
        %1555 = vxpose.xlu0.b32.start [1/16] %v1522, 128
        %1556 = vxpose.xlu0.b32.cont [2/16] 0.0, 128
        %1557 = vxpose.xlu0.b32.cont [3/16] 0.0, 128
        %1558 = vxpose.xlu0.b32.cont [4/16] 0.0, 128
        %1559 = vxpose.xlu0.b32.cont [5/16] 0.0, 128
        %1560 = vxpose.xlu0.b32.cont [6/16] 0.0, 128
        %1561 = vxpose.xlu0.b32.cont [7/16] 0.0, 128
        %1562 = vxpose.xlu0.b32.cont [8/16] 0.0, 128
        %1563 = vxpose.xlu0.b32.cont [9/16] 0.0, 128
        %1564 = vxpose.xlu0.b32.cont [10/16] 0.0, 128
        %1565 = vxpose.xlu0.b32.cont [11/16] 0.0, 128
        %1566 = vxpose.xlu0.b32.cont [12/16] 0.0, 128
        %1567 = vxpose.xlu0.b32.cont [13/16] 0.0, 128
        %1568 = vxpose.xlu0.b32.cont [14/16] 0.0, 128
        %1569 = vxpose.xlu0.b32.cont [15/16] 0.0, 128
        %1570 = vxpose.xlu0.b32.end [16/16] 0.0, 128
        %v1571 = vpop.trf.xlu0
        %v1572 = vpop.trf.xlu0
        %v1573 = vpop.trf.xlu0
        %v1574 = vpop.trf.xlu0
        %v1575 = vpop.trf.xlu0
        %v1576 = vpop.trf.xlu0
        %v1577 = vpop.trf.xlu0
        %v1578 = vpop.trf.xlu0
        %v1579 = vpop.trf.xlu0
        %v1580 = vpop.trf.xlu0
        %v1581 = vpop.trf.xlu0
        %v1582 = vpop.trf.xlu0
        %v1583 = vpop.trf.xlu0
        %v1584 = vpop.trf.xlu0
        %v1585 = vpop.trf.xlu0
        %v1586 = vpop.trf.xlu0
        %v1588 = vsel %vm492, %v1539, 0
        %v1591 = vsel %vm492, %v1540, 0
        %v1594 = vsel %vm492, %v1541, 0
        %v1597 = vsel %vm492, %v1542, 0
        %v1600 = vsel %vm492, %v1543, 0
        %v1603 = vsel %vm492, %v1544, 0
        %v1606 = vsel %vm492, %v1545, 0
        %v1609 = vsel %vm492, %v1546, 0
        %v1612 = vsel %vm492, %v1547, 0
        %v1615 = vsel %vm492, %v1548, 0
        %v1618 = vsel %vm492, %v1549, 0
        %v1621 = vsel %vm492, %v1550, 0
        %v1624 = vsel %vm492, %v1551, 0
        %v1627 = vsel %vm492, %v1552, 0
        %v1630 = vsel %vm492, %v1553, 0
        %v1633 = vsel %vm492, %v1554, 0
        %v1636 = vsel %vm492, %v1571, 0
        %v1639 = vsel %vm492, %v1572, 0
        %v1642 = vsel %vm492, %v1573, 0
        %v1645 = vsel %vm492, %v1574, 0
        %v1648 = vsel %vm492, %v1575, 0
        %v1651 = vsel %vm492, %v1576, 0
        %v1654 = vsel %vm492, %v1577, 0
        %v1657 = vsel %vm492, %v1578, 0
        %v1660 = vsel %vm492, %v1579, 0
        %v1663 = vsel %vm492, %v1580, 0
        %v1666 = vsel %vm492, %v1581, 0
        %v1669 = vsel %vm492, %v1582, 0
        %v1672 = vsel %vm492, %v1583, 0
        %v1675 = vsel %vm492, %v1584, 0
        %v1678 = vsel %vm492, %v1585, 0
        %v1681 = vsel %vm492, %v1586, 0
        %1683 = vmatprep.subr.mxu0 0.0
        %1684 = vmatpush1.msra.mxu0 %v371
        %1685 = vmatprep.subr.mxu0 0.0
        %1686 = vmatpush1.msra.mxu0 0.0
        %1687 = vmatprep.subr.mxu0 0.0
        %1688 = vmatpush1.msra.mxu0 0.0
        %1689 = vmatprep.subr.mxu0 0.0
        %1690 = vmatpush1.msra.mxu0 0.0
        %1691 = vmatprep.subr.mxu0 0.0
        %1692 = vmatpush1.msra.mxu0 0.0
        %1693 = vmatprep.subr.mxu0 0.0
        %1694 = vmatpush1.msra.mxu0 0.0
        %1695 = vmatprep.subr.mxu0 0.0
        %1696 = vmatpush1.msra.mxu0 0.0
        %1697 = vmatprep.subr.mxu0 0.0
        %1698 = vmatpush1.msra.mxu0 0.0
        %1699 = vmatprep.subr.mxu0 0.0
        %1700 = vmatpush1.msra.mxu0 0.0
        %1701 = vmatprep.subr.mxu0 0.0
        %1702 = vmatpush1.msra.mxu0 0.0
        %1703 = vmatprep.subr.mxu0 0.0
        %1704 = vmatpush1.msra.mxu0 0.0
        %1705 = vmatprep.subr.mxu0 0.0
        %1706 = vmatpush1.msra.mxu0 0.0
        %1707 = vmatprep.subr.mxu0 0.0
        %1708 = vmatpush1.msra.mxu0 0.0
        %1709 = vmatprep.subr.mxu0 0.0
        %1710 = vmatpush1.msra.mxu0 0.0
        %1711 = vmatprep.subr.mxu0 0.0
        %1712 = vmatpush1.msra.mxu0 0.0
        %1713 = vmatprep.subr.mxu0 0.0
        %1714 = vmatpush1.msra.mxu0 0.0
        %1715 = vmatprep.subr.mxu0 0.0
        %1716 = vmatpush1.msra.mxu0 0.0
        %1717 = vmatprep.subr.mxu0 0.0
        %1718 = vmatpush1.msra.mxu0 0.0
        %1719 = vmatprep.subr.mxu0 0.0
        %1720 = vmatpush1.msra.mxu0 0.0
        %1721 = vmatprep.subr.mxu0 0.0
        %1722 = vmatpush1.msra.mxu0 0.0
        %1723 = vmatprep.subr.mxu0 0.0
        %1724 = vmatpush1.msra.mxu0 0.0
        %1725 = vmatprep.subr.mxu0 0.0
        %1726 = vmatpush1.msra.mxu0 0.0
        %1727 = vmatprep.subr.mxu0 0.0
        %1728 = vmatpush1.msra.mxu0 0.0
        %1729 = vmatprep.subr.mxu0 0.0
        %1730 = vmatpush1.msra.mxu0 0.0
        %1731 = vmatprep.subr.mxu0 0.0
        %1732 = vmatpush1.msra.mxu0 0.0
        %1733 = vmatprep.subr.mxu0 0.0
        %1734 = vmatpush1.msra.mxu0 0.0
        %1735 = vmatprep.subr.mxu0 0.0
        %1736 = vmatpush1.msra.mxu0 0.0
        %1737 = vmatprep.subr.mxu0 0.0
        %1738 = vmatpush1.msra.mxu0 0.0
        %1739 = vmatprep.subr.mxu0 0.0
        %1740 = vmatpush1.msra.mxu0 0.0
        %1741 = vmatprep.subr.mxu0 0.0
        %1742 = vmatpush1.msra.mxu0 0.0
        %1743 = vmatprep.subr.mxu0 0.0
        %1744 = vmatpush1.msra.mxu0 0.0
        %1745 = vmatprep.subr.mxu0 0.0
        %1746 = vmatpush1.msra.mxu0 0.0
        %1747 = vmatprep.mubr.f32.mxu0 0.0
        %1748 = vmatmul.mubr.f32.gmra.mrb[0].mxu0 %v1588
        %v1749 = vpop.f32.mrb[0].mxu0
        %v1750 = vadd.f32 %v490, %v1749
        %v1751 = vpop.f32.mrb[0].mxu0
        %1752 = vmatprep.mubr.f32.mxu0 0.0
        %1753 = vmatmul.mubr.f32.gmra.mrb[0].mxu0 %v1591
        %v1754 = vpop.f32.mrb[0].mxu0
        %v1755 = vadd.f32 %v490, %v1754
        %v1756 = vpop.f32.mrb[0].mxu0
        %1757 = vmatprep.mubr.f32.mxu0 0.0
        %1758 = vmatmul.mubr.f32.gmra.mrb[0].mxu0 %v1594
        %v1759 = vpop.f32.mrb[0].mxu0
        %v1760 = vadd.f32 %v490, %v1759
        %v1761 = vpop.f32.mrb[0].mxu0
        %1762 = vmatprep.mubr.f32.mxu0 0.0
        %1763 = vmatmul.mubr.f32.gmra.mrb[0].mxu0 %v1597
        %v1764 = vpop.f32.mrb[0].mxu0
        %v1765 = vadd.f32 %v490, %v1764
        %v1766 = vpop.f32.mrb[0].mxu0
        %1767 = vmatprep.mubr.f32.mxu0 0.0
        %1768 = vmatmul.mubr.f32.gmra.mrb[0].mxu0 %v1600
        %v1769 = vpop.f32.mrb[0].mxu0
        %v1770 = vadd.f32 %v490, %v1769
        %v1771 = vpop.f32.mrb[0].mxu0
        %1772 = vmatprep.mubr.f32.mxu0 0.0
        %1773 = vmatmul.mubr.f32.gmra.mrb[0].mxu0 %v1603
        %v1774 = vpop.f32.mrb[0].mxu0
        %v1775 = vadd.f32 %v490, %v1774
        %v1776 = vpop.f32.mrb[0].mxu0
        %1777 = vmatprep.mubr.f32.mxu0 0.0
        %1778 = vmatmul.mubr.f32.gmra.mrb[0].mxu0 %v1606
        %v1779 = vpop.f32.mrb[0].mxu0
        %v1780 = vadd.f32 %v490, %v1779
        %v1781 = vpop.f32.mrb[0].mxu0
        %1782 = vmatprep.mubr.f32.mxu0 0.0
        %1783 = vmatmul.mubr.f32.gmra.mrb[0].mxu0 %v1609
        %v1784 = vpop.f32.mrb[0].mxu0
        %v1785 = vadd.f32 %v490, %v1784
        %v1786 = vpop.f32.mrb[0].mxu0
        %1787 = vmatprep.mubr.f32.mxu0 0.0
        %1788 = vmatmul.mubr.f32.gmra.mrb[0].mxu0 %v1612
        %v1789 = vpop.f32.mrb[0].mxu0
        %v1790 = vadd.f32 %v490, %v1789
        %v1791 = vpop.f32.mrb[0].mxu0
        %1792 = vmatprep.mubr.f32.mxu0 0.0
        %1793 = vmatmul.mubr.f32.gmra.mrb[0].mxu0 %v1615
        %v1794 = vpop.f32.mrb[0].mxu0
        %v1795 = vadd.f32 %v490, %v1794
        %v1796 = vpop.f32.mrb[0].mxu0
        %1797 = vmatprep.mubr.f32.mxu0 0.0
        %1798 = vmatmul.mubr.f32.gmra.mrb[0].mxu0 %v1618
        %v1799 = vpop.f32.mrb[0].mxu0
        %v1800 = vadd.f32 %v490, %v1799
        %v1801 = vpop.f32.mrb[0].mxu0
        %1802 = vmatprep.mubr.f32.mxu0 0.0
        %1803 = vmatmul.mubr.f32.gmra.mrb[0].mxu0 %v1621
        %v1804 = vpop.f32.mrb[0].mxu0
        %v1805 = vadd.f32 %v490, %v1804
        %v1806 = vpop.f32.mrb[0].mxu0
        %1807 = vmatprep.mubr.f32.mxu0 0.0
        %1808 = vmatmul.mubr.f32.gmra.mrb[0].mxu0 %v1624
        %v1809 = vpop.f32.mrb[0].mxu0
        %v1810 = vadd.f32 %v490, %v1809
        %v1811 = vpop.f32.mrb[0].mxu0
        %1812 = vmatprep.mubr.f32.mxu0 0.0
        %1813 = vmatmul.mubr.f32.gmra.mrb[0].mxu0 %v1627
        %v1814 = vpop.f32.mrb[0].mxu0
        %v1815 = vadd.f32 %v490, %v1814
        %v1816 = vpop.f32.mrb[0].mxu0
        %1817 = vmatprep.mubr.f32.mxu0 0.0
        %1818 = vmatmul.mubr.f32.gmra.mrb[0].mxu0 %v1630
        %v1819 = vpop.f32.mrb[0].mxu0
        %v1820 = vadd.f32 %v490, %v1819
        %v1821 = vpop.f32.mrb[0].mxu0
        %1822 = vmatprep.mubr.f32.mxu0 0.0
        %1823 = vmatmul.mubr.f32.gmra.mrb[0].mxu0 %v1633
        %v1824 = vpop.f32.mrb[0].mxu0
        %v1825 = vadd.f32 %v490, %v1824
        %v1826 = vpop.f32.mrb[0].mxu0
        %1827 = vmatprep.mubr.f32.mxu0 0.0
        %1828 = vmatmul.mubr.f32.gmra.mrb[0].mxu0 %v1636
        %v1829 = vpop.f32.mrb[0].mxu0
        %v1830 = vadd.f32 %v490, %v1829
        %v1831 = vpop.f32.mrb[0].mxu0
        %1832 = vmatprep.mubr.f32.mxu0 0.0
        %1833 = vmatmul.mubr.f32.gmra.mrb[0].mxu0 %v1639
        %v1834 = vpop.f32.mrb[0].mxu0
        %v1835 = vadd.f32 %v490, %v1834
        %v1836 = vpop.f32.mrb[0].mxu0
        %1837 = vmatprep.mubr.f32.mxu0 0.0
        %1838 = vmatmul.mubr.f32.gmra.mrb[0].mxu0 %v1642
        %v1839 = vpop.f32.mrb[0].mxu0
        %v1840 = vadd.f32 %v490, %v1839
        %v1841 = vpop.f32.mrb[0].mxu0
        %1842 = vmatprep.mubr.f32.mxu0 0.0
        %1843 = vmatmul.mubr.f32.gmra.mrb[0].mxu0 %v1645
        %v1844 = vpop.f32.mrb[0].mxu0
        %v1845 = vadd.f32 %v490, %v1844
        %v1846 = vpop.f32.mrb[0].mxu0
        %1847 = vmatprep.mubr.f32.mxu0 0.0
        %1848 = vmatmul.mubr.f32.gmra.mrb[0].mxu0 %v1648
        %v1849 = vpop.f32.mrb[0].mxu0
        %v1850 = vadd.f32 %v490, %v1849
        %v1851 = vpop.f32.mrb[0].mxu0
        %1852 = vmatprep.mubr.f32.mxu0 0.0
        %1853 = vmatmul.mubr.f32.gmra.mrb[0].mxu0 %v1651
        %v1854 = vpop.f32.mrb[0].mxu0
        %v1855 = vadd.f32 %v490, %v1854
        %v1856 = vpop.f32.mrb[0].mxu0
        %1857 = vmatprep.mubr.f32.mxu0 0.0
        %1858 = vmatmul.mubr.f32.gmra.mrb[0].mxu0 %v1654
        %v1859 = vpop.f32.mrb[0].mxu0
        %v1860 = vadd.f32 %v490, %v1859
        %v1861 = vpop.f32.mrb[0].mxu0
        %1862 = vmatprep.mubr.f32.mxu0 0.0
        %1863 = vmatmul.mubr.f32.gmra.mrb[0].mxu0 %v1657
        %v1864 = vpop.f32.mrb[0].mxu0
        %v1865 = vadd.f32 %v490, %v1864
        %v1866 = vpop.f32.mrb[0].mxu0
        %1867 = vmatprep.mubr.f32.mxu0 0.0
        %1868 = vmatmul.mubr.f32.gmra.mrb[0].mxu0 %v1660
        %v1869 = vpop.f32.mrb[0].mxu0
        %v1870 = vadd.f32 %v490, %v1869
        %v1871 = vpop.f32.mrb[0].mxu0
        %1872 = vmatprep.mubr.f32.mxu0 0.0
        %1873 = vmatmul.mubr.f32.gmra.mrb[0].mxu0 %v1663
        %v1874 = vpop.f32.mrb[0].mxu0
        %v1875 = vadd.f32 %v490, %v1874
        %v1876 = vpop.f32.mrb[0].mxu0
        %1877 = vmatprep.mubr.f32.mxu0 0.0
        %1878 = vmatmul.mubr.f32.gmra.mrb[0].mxu0 %v1666
        %v1879 = vpop.f32.mrb[0].mxu0
        %v1880 = vadd.f32 %v490, %v1879
        %v1881 = vpop.f32.mrb[0].mxu0
        %1882 = vmatprep.mubr.f32.mxu0 0.0
        %1883 = vmatmul.mubr.f32.gmra.mrb[0].mxu0 %v1669
        %v1884 = vpop.f32.mrb[0].mxu0
        %v1885 = vadd.f32 %v490, %v1884
        %v1886 = vpop.f32.mrb[0].mxu0
        %1887 = vmatprep.mubr.f32.mxu0 0.0
        %1888 = vmatmul.mubr.f32.gmra.mrb[0].mxu0 %v1672
        %v1889 = vpop.f32.mrb[0].mxu0
        %v1890 = vadd.f32 %v490, %v1889
        %v1891 = vpop.f32.mrb[0].mxu0
        %1892 = vmatprep.mubr.f32.mxu0 0.0
        %1893 = vmatmul.mubr.f32.gmra.mrb[0].mxu0 %v1675
        %v1894 = vpop.f32.mrb[0].mxu0
        %v1895 = vadd.f32 %v490, %v1894
        %v1896 = vpop.f32.mrb[0].mxu0
        %1897 = vmatprep.mubr.f32.mxu0 0.0
        %1898 = vmatmul.mubr.f32.gmra.mrb[0].mxu0 %v1678
        %v1899 = vpop.f32.mrb[0].mxu0
        %v1900 = vadd.f32 %v490, %v1899
        %v1901 = vpop.f32.mrb[0].mxu0
        %1902 = vmatprep.mubr.f32.mxu0 0.0
        %1903 = vmatmul.mubr.f32.gmra.mrb[0].mxu0 %v1681
        %v1904 = vpop.f32.mrb[0].mxu0
        %v1905 = vadd.f32 %v490, %v1904
        %v1906 = vpop.f32.mrb[0].mxu0
        %1907 = vdwg.mxu0
        %1908 = vst [vmem:[%s325 + $0x40] sm:$0xff] %v1750
        %1909 = vst [vmem:[%s325 + $0x48] sm:$0xff] %v1755
        %1910 = vst [vmem:[%s325 + $0x50] sm:$0xff] %v1760
        %1911 = vst [vmem:[%s325 + $0x58] sm:$0xff] %v1765
        %1912 = vst [vmem:[%s325 + $0x60] sm:$0xff] %v1770
        %1913 = vst [vmem:[%s325 + $0x68] sm:$0xff] %v1775
        %1914 = vst [vmem:[%s325 + $0x70] sm:$0xff] %v1780
        %1915 = vst [vmem:[%s325 + $0x78] sm:$0xff] %v1785
        %1916 = vst [vmem:[%s325 + $0x80] sm:$0xff] %v1790
        %1917 = vst [vmem:[%s325 + $0x88] sm:$0xff] %v1795
        %1918 = vst [vmem:[%s325 + $0x90] sm:$0xff] %v1800
        %1919 = vst [vmem:[%s325 + $0x98] sm:$0xff] %v1805
        %1920 = vst [vmem:[%s325 + $0xa0] sm:$0xff] %v1810
        %1921 = vst [vmem:[%s325 + $0xa8] sm:$0xff] %v1815
        %1922 = vst [vmem:[%s325 + $0xb0] sm:$0xff] %v1820
        %1923 = vst [vmem:[%s325 + $0xb8] sm:$0xff] %v1825
        %1924 = vst [vmem:[%s325 + $0xc0] sm:$0xff] %v1830
        %1925 = vst [vmem:[%s325 + $0xc8] sm:$0xff] %v1835
        %1926 = vst [vmem:[%s325 + $0xd0] sm:$0xff] %v1840
        %1927 = vst [vmem:[%s325 + $0xd8] sm:$0xff] %v1845
        %1928 = vst [vmem:[%s325 + $0xe0] sm:$0xff] %v1850
        %1929 = vst [vmem:[%s325 + $0xe8] sm:$0xff] %v1855
        %1930 = vst [vmem:[%s325 + $0xf0] sm:$0xff] %v1860
        %1931 = vst [vmem:[%s325 + $0xf8] sm:$0xff] %v1865
        %1932 = vst [vmem:[%s325 + $0x100] sm:$0xff] %v1870
        %1933 = vst [vmem:[%s325 + $0x108] sm:$0xff] %v1875
        %1934 = vst [vmem:[%s325 + $0x110] sm:$0xff] %v1880
        %1935 = vst [vmem:[%s325 + $0x118] sm:$0xff] %v1885
        %1936 = vst [vmem:[%s325 + $0x120] sm:$0xff] %v1890
        %1937 = vst [vmem:[%s325 + $0x128] sm:$0xff] %v1895
        %1938 = vst [vmem:[%s325 + $0x130] sm:$0xff] %v1900
        %1939 = vst [vmem:[%s325 + $0x138] sm:$0xff] %v1905
        %s1940 = sand.u32 %s225, 1
        %s1941 = scalar_lea.sflag [#allocation3], %s1940
        %s1942 = sand.u32 %s225, 1
        %s1943 = smul.addr %s1942, 320
        %s1944 = scalar_lea.vmem [#allocation2], %s1943
        // Predicated region
        $region57: #{bi_adapter_lsa.1} parent=55 // pred_check
          %p1945 = pneg %p235
        $region58: #{bi_adapter_lsa.1} parent=55 // pred_check_branch
          %1947 = sbr.rel (%p1945) target = $region60
        $region59: #{bi_adapter_lsa.1} parent=55 // pred_region
          %s1949 = ssub.s32 5120, 5120
          %1950 = vsyncadd %s1941, %s1949
          %s1951 = smul.addr %s23, 40
          %s1952 = smul.addr %s1951, 128
          %s1953 = scalar_lea.hbm %s9, %s1952
          %s1954 = sshll.u32 %s1944, 4
          %s1955 = int_to_ptr.vmem [resolvable:$true] %s1954
          %1960 = dma.vmem_to_hbm [thread:$0]  %s1955, 5120, %s1953, %s1941, 128, 128, 8
        $region60: #{bi_adapter_lsa.1} parent=55 // pred_fallthru
          _
      $region56: #{bi_adapter_lsa.1} parent=5 // pred_fallthru
        _
      %p1961 = scmp.le.s32.totalorder 2, %s18
      // Predicated region
      $region61: #{bi_adapter_lsa.1} parent=5 // pred_check
        %p1962 = pneg %p1961
      $region62: #{bi_adapter_lsa.1} parent=5 // pred_check_branch
        %1964 = sbr.rel (%p1962) target = $region64
      $region63: #{bi_adapter_lsa.1} parent=5 // pred_region
        %s1965 = ssub.s32 %s18, 2
        // Predicated region
        $region65: #{bi_adapter_lsa.1} parent=63 // pred_check
          %p1966 = pneg %p241
        $region66: #{bi_adapter_lsa.1} parent=63 // pred_check_branch
          %1968 = sbr.rel (%p1966) target = $region68
        $region67: #{bi_adapter_lsa.1} parent=63 // pred_region
          %s1969 = sand.u32 %s226, 1
          %s1970 = scalar_lea.sflag [#allocation3], %s1969
          %s1971 = sand.u32 %s226, 1
          %s1972 = smul.addr %s1971, 320
          %s1973 = scalar_lea.vmem [#allocation2], %s1972
          %1974 = dma.done %s1970, 5120
        $region68: #{bi_adapter_lsa.1} parent=63 // pred_fallthru
          _
      $region64: #{bi_adapter_lsa.1} parent=5 // pred_fallthru
        _
    $region6: #{bi_adapter_lsa.1} parent=1 // loop_footer
      %s22 = sadd.s32 1, %s18
    $region7: #{bi_adapter_lsa.1} parent=1 // loop_footer_branch
      %17 = sbr.rel target = $region3
    $region8: #{bi_adapter_lsa.1} parent=1 // loop_exit
      _
    %1975 = vsyncpa [#allocation3], 1
    %s1976 = scalar_lea.sflag [#allocation3], 1
    %1977 = vsyncpa %s1976, 1

</llo_original>
